<compile_context>
chip_gen: v7x
topology: tpu7x:2x2x1
jax: 0.10.0
libtpu: 0.0.40
codegen_flags: <defaults>
</compile_context>

<pallas_src>
import functools

import jax
import jax.numpy as jnp
from jax.experimental import pallas as pl
from jax.experimental.pallas import tpu as pltpu


LANE = 128            # lane width: feature dims padded to multiples of this
TILE_ALIGN = 16       # batch-tile alignment (bf16 sublane; also covers f32's 8)
MAX_TILE_B = 512      # largest batch tile (amortizes per-step overhead)
MIN_SPLIT_TILE = 128  # only split the batch across cores when each half >= this


def _round_up(n, m):
    return ((n + m - 1) // m) * m


def _cdiv(a, b):
    return -(-a // b)


def _pad_to(a, shape):
    pads = [(0, s - d) for d, s in zip(a.shape, shape)]
    if all(p == (0, 0) for p in pads):
        return a
    return jnp.pad(a, pads)


def twonn_kernel(x_ref, w1_ref, b1_ref, w2_ref, b2_ref, w3_ref, b3_ref, o_ref):
    # Fused hot path: fc1 -> ReLU -> fc2 -> ReLU -> fc3.
    # x arrives f32 (no extra HBM pass for a bf16 copy); the bf16 cast for the
    # MXU happens here on the VPU.  Accumulation + bias/ReLU epilogue stay f32.
    x = x_ref[...].astype(jnp.bfloat16)

    h1 = jnp.dot(x, w1_ref[...], preferred_element_type=jnp.float32) + b1_ref[...]
    h1 = jnp.maximum(h1, 0.0).astype(jnp.bfloat16)

    h2 = jnp.dot(h1, w2_ref[...], preferred_element_type=jnp.float32) + b2_ref[...]
    h2 = jnp.maximum(h2, 0.0).astype(jnp.bfloat16)

    h3 = jnp.dot(h2, w3_ref[...], preferred_element_type=jnp.float32) + b3_ref[...]
    o_ref[...] = h3.astype(o_ref.dtype)


def prepare_params(params):
    """Pad feature dims to lane multiples and cast weights to bf16 ONCE.

    Call this outside the per-step forward and reuse the result, so the forward
    never re-reads / re-writes the weights in HBM just to pad/cast them.

    Zero padding is semantics-preserving: padded hidden columns have zero
    weights + zero bias -> ReLU(0) = 0 -> no downstream contribution; padded
    class columns are sliced off by the wrapper.
    """
    w1, b1, w2, b2, w3, b3 = params
    in_features, num_hiddens = w1.shape
    num_classes = w3.shape[1]
    h_pad = _round_up(num_hiddens, LANE)
    c_pad = _round_up(num_classes, LANE)

    prepped = (
        _pad_to(w1, (in_features, h_pad)).astype(jnp.bfloat16),
        _pad_to(b1.reshape(1, -1), (1, h_pad)).astype(jnp.float32),
        _pad_to(w2, (h_pad, h_pad)).astype(jnp.bfloat16),
        _pad_to(b2.reshape(1, -1), (1, h_pad)).astype(jnp.float32),
        _pad_to(w3, (h_pad, c_pad)).astype(jnp.bfloat16),
        _pad_to(b3.reshape(1, -1), (1, c_pad)).astype(jnp.float32),
    )
    return prepped, num_classes


@functools.partial(
    jax.jit, static_argnames=("num_classes", "tile_b", "single_buffer_weights"))
def _twonn_forward(x, prepped, *, num_classes, tile_b, single_buffer_weights):
    if x.ndim == 4:
        x = x.reshape(x.shape[0], -1)  # matches x.view(x.size(0), -1)
    x = x.astype(jnp.float32)

    w1_p, b1_p, w2_p, b2_p, w3_p, b3_p = prepped
    B, in_features = x.shape
    h_pad = w1_p.shape[1]
    c_pad = w3_p.shape[1]

    # Batch tile (all static at trace time):
    #  * multiple of 16 (bf16 sublane packing; also satisfies f32's 8),
    #  * capped at MAX_TILE_B to amortize per-grid-step overhead,
    #  * split into >= 2 tiles when each half is still MXU-sized so both v7x
    #    TensorCores get work.
    if tile_b is None:
        b_al = _round_up(B, TILE_ALIGN)
        half = _round_up(_cdiv(b_al, 2), TILE_ALIGN)
        tile_b = b_al if half < MIN_SPLIT_TILE else min(MAX_TILE_B, half)
    elif tile_b % TILE_ALIGN != 0:
        raise ValueError(f"tile_b must be a multiple of {TILE_ALIGN}, got {tile_b}")
    b_pad = _round_up(B, tile_b)
    grid_b = b_pad // tile_b

    # Only padding (no dtype change) on x; when B is already a tile multiple
    # this is a no-op and x goes straight to the kernel in its f32 layout.
    x_p = _pad_to(x, (b_pad, in_features))

    # Grid-invariant operands (constant index_map) are DMA'd once; single-
    # buffer them to halve their VMEM footprint (matters on v7x: 64 MiB).
    resident_kw = {"pipeline_mode": pl.Buffered(1)} if single_buffer_weights else {}

    w_bytes = 2 * (in_features * h_pad + h_pad * h_pad + h_pad * c_pad)  # bf16
    bias_bytes = 4 * (2 * h_pad + c_pad)
    flops = 2 * b_pad * (in_features * h_pad + h_pad * h_pad + h_pad * c_pad)
    bytes_accessed = b_pad * in_features * 4 + b_pad * c_pad * 4 + w_bytes + bias_bytes

    # Explicit VMEM limit: double-buffered x/out tiles + resident weights with
    # 2x headroom, clamped to [16 MiB, 64 MiB] (v5e scoped default is 16 MiB,
    # v7x physical VMEM is 64 MiB).
    vmem_need = (2 * tile_b * in_features * 4 + 2 * tile_b * c_pad * 4
                 + w_bytes + bias_bytes)
    vmem_limit = min(64 * 1024 * 1024, max(16 * 1024 * 1024, 2 * vmem_need))

    out_padded = pl.pallas_call(
        twonn_kernel,
        out_shape=jax.ShapeDtypeStruct((b_pad, c_pad), jnp.float32),
        grid=(grid_b,),
        in_specs=[
            # x is tiled over batch; weights/biases stay resident.
            pl.BlockSpec((tile_b, in_features), lambda i: (i, 0)),
            pl.BlockSpec((in_features, h_pad), lambda i: (0, 0), **resident_kw),
            pl.BlockSpec((1, h_pad), lambda i: (0, 0), **resident_kw),
            pl.BlockSpec((h_pad, h_pad), lambda i: (0, 0), **resident_kw),
            pl.BlockSpec((1, h_pad), lambda i: (0, 0), **resident_kw),
            pl.BlockSpec((h_pad, c_pad), lambda i: (0, 0), **resident_kw),
            pl.BlockSpec((1, c_pad), lambda i: (0, 0), **resident_kw),
        ],
        out_specs=pl.BlockSpec((tile_b, c_pad), lambda i: (i, 0)),
        compiler_params=pltpu.CompilerParams(
            dimension_semantics=("parallel",),  # megacore split on v7x
            vmem_limit_bytes=int(vmem_limit),
        ),
        cost_estimate=pl.CostEstimate(
            flops=int(flops), transcendentals=0, bytes_accessed=int(bytes_accessed)),
    )(x_p, w1_p, b1_p, w2_p, b2_p, w3_p, b3_p)

    return out_padded[:B, :num_classes]


# Whether this Pallas build supports pipeline_mode=pl.Buffered on pallas_call
# BlockSpecs; flipped off transparently if the first compile rejects it.
_single_buffer_ok = [hasattr(pl, "Buffered")]


def twonn_forward(x, prepped, num_classes, tile_b=None):
    """x: (B, C, H, W) or (B, in_features). Returns (B, num_classes) f32."""
    if _single_buffer_ok[0]:
        try:
            return _twonn_forward(x, prepped, num_classes=num_classes,
                                  tile_b=tile_b, single_buffer_weights=True)
        except Exception:
            _single_buffer_ok[0] = False  # fall back to default double buffering
    return _twonn_forward(x, prepped, num_classes=num_classes,
                          tile_b=tile_b, single_buffer_weights=False)


def init_params(key, in_features, num_hiddens, num_classes):
    """Deterministic synthetic init; weights stored as (in, out), f32 master."""
    ks = jax.random.split(key, 6)

    def lin(kw, kb, fan_in, fan_out):
        # Kaiming-uniform-ish bound like PyTorch's default Linear init.
        bound = 1.0 / jnp.sqrt(fan_in)
        w = jax.random.uniform(kw, (fan_in, fan_out), jnp.float32, -bound, bound)
        b = jax.random.uniform(kb, (1, fan_out), jnp.float32, -bound, bound)
        return w, b

    w1, b1 = lin(ks[0], ks[1], in_features, num_hiddens)
    w2, b2 = lin(ks[2], ks[3], num_hiddens, num_hiddens)
    w3, b3 = lin(ks[4], ks[5], num_hiddens, num_classes)
    return (w1, b1, w2, b2, w3, b3)


if __name__ == "__main__":
    key = jax.random.PRNGKey(0)
    kx, kp = jax.random.split(key)

    # Small shapes consistent with the module: x is (B, C, H, W) -> flattened.
    B, C, H, W = 2, 4, 16, 16
    in_features = C * H * W          # 1024
    num_hiddens = 32
    num_classes = 10

    x = jax.random.normal(kx, (B, C, H, W), jnp.float32)
    params = init_params(kp, in_features, num_hiddens, num_classes)

    # One-time weight prep (pad to lane multiples + bf16 cast), reused per call.
    prepped, n_cls = prepare_params(params)

    out = twonn_forward(x, prepped, num_classes=n_cls)
    out = jax.block_until_ready(out)
    assert out.shape == (B, num_classes)

    # Reference with the same dtype chain as the kernel (bf16 matmul inputs,
    # f32 accumulation + epilogue).
    xf = x.reshape(B, -1).astype(jnp.bfloat16)
    w1, b1, w2, b2, w3, b3 = params
    r = jnp.dot(xf, w1.astype(jnp.bfloat16), preferred_element_type=jnp.float32) + b1
    r = jnp.maximum(r, 0.0).astype(jnp.bfloat16)
    r = jnp.dot(r, w2.astype(jnp.bfloat16), preferred_element_type=jnp.float32) + b2
    r = jnp.maximum(r, 0.0).astype(jnp.bfloat16)
    r = jnp.dot(r, w3.astype(jnp.bfloat16), preferred_element_type=jnp.float32) + b3
    assert jnp.allclose(out, r, atol=2e-3, rtol=2e-3), "mismatch vs bf16 reference"

    # Looser check against the pure-f32 PyTorch-equivalent math.
    xf32 = x.reshape(B, -1)
    ref = jnp.maximum(xf32 @ w1 + b1, 0.0)
    ref = jnp.maximum(ref @ w2 + b2, 0.0)
    ref = ref @ w3 + b3
    assert jnp.allclose(out, ref, atol=5e-2, rtol=5e-2), "mismatch vs f32 reference"

    print("KERNEL_OK")
</pallas_src>

<mosaic_0001>
module attributes {stable_mosaic.version = 11 : i64} {
  func.func @twonn_kernel(%arg0: i32, %arg1: memref<16x1024xf32, #tpu.memory_space<vmem>>, %arg2: memref<1024x128xbf16, #tpu.memory_space<vmem>>, %arg3: memref<1x128xf32, #tpu.memory_space<vmem>>, %arg4: memref<128x128xbf16, #tpu.memory_space<vmem>>, %arg5: memref<1x128xf32, #tpu.memory_space<vmem>>, %arg6: memref<128x128xbf16, #tpu.memory_space<vmem>>, %arg7: memref<1x128xf32, #tpu.memory_space<vmem>>, %arg8: memref<16x128xf32, #tpu.memory_space<vmem>>) attributes {dimension_semantics = [#tpu.dimension_semantics<parallel>], iteration_bounds = array<i64: 1>, scalar_prefetch = 0 : i64, scratch_operands = 0 : i64, tpu.core_type = #tpu.core_type<tc>, window_params = [{transform_indices = @transform_0, window_bounds = array<i64: 16, 1024>}, {pipeline_mode = #tpu.pipeline_mode<synchronous>, transform_indices = @transform_1, window_bounds = array<i64: 1024, 128>}, {pipeline_mode = #tpu.pipeline_mode<synchronous>, transform_indices = @transform_2, window_bounds = array<i64: 1, 128>}, {pipeline_mode = #tpu.pipeline_mode<synchronous>, transform_indices = @transform_3, window_bounds = array<i64: 128, 128>}, {pipeline_mode = #tpu.pipeline_mode<synchronous>, transform_indices = @transform_4, window_bounds = array<i64: 1, 128>}, {pipeline_mode = #tpu.pipeline_mode<synchronous>, transform_indices = @transform_5, window_bounds = array<i64: 128, 128>}, {pipeline_mode = #tpu.pipeline_mode<synchronous>, transform_indices = @transform_6, window_bounds = array<i64: 1, 128>}, {transform_indices = @transform_7, window_bounds = array<i64: 16, 128>}]} {
    %c0 = arith.constant 0 : index
    %c0_0 = arith.constant 0 : index
    %0 = vector.load %arg1[%c0, %c0_0] : memref<16x1024xf32, #tpu.memory_space<vmem>>, vector<16x1024xf32>
    %1 = arith.truncf %0 : vector<16x1024xf32> to vector<16x1024xbf16>
    %c0_1 = arith.constant 0 : index
    %c0_2 = arith.constant 0 : index
    %2 = vector.load %arg2[%c0_1, %c0_2] : memref<1024x128xbf16, #tpu.memory_space<vmem>>, vector<1024x128xbf16>
    %cst = arith.constant dense<0.000000e+00> : vector<16x128xf32>
    %3 = tpu.matmul %1, %2, %cst {dimension_numbers = #tpu.dot_dimension_numbers<[1], [0], [0], [1], [0, 0, 1, 1], [], []>} : vector<16x1024xbf16>, vector<1024x128xbf16>, vector<16x128xf32> -> vector<16x128xf32>
    %c0_3 = arith.constant 0 : index
    %c0_4 = arith.constant 0 : index
    %4 = vector.load %arg3[%c0_3, %c0_4] : memref<1x128xf32, #tpu.memory_space<vmem>>, vector<1x128xf32>
    %5 = vector.broadcast %4 : vector<1x128xf32> to vector<16x128xf32>
    %6 = arith.addf %3, %5 : vector<16x128xf32>
    %cst_5 = arith.constant 0.000000e+00 : f32
    %7 = vector.broadcast %cst_5 : f32 to vector<16x128xf32>
    %8 = arith.maximumf %6, %7 : vector<16x128xf32>
    %9 = arith.truncf %8 : vector<16x128xf32> to vector<16x128xbf16>
    %c0_6 = arith.constant 0 : index
    %c0_7 = arith.constant 0 : index
    %10 = vector.load %arg4[%c0_6, %c0_7] : memref<128x128xbf16, #tpu.memory_space<vmem>>, vector<128x128xbf16>
    %cst_8 = arith.constant dense<0.000000e+00> : vector<16x128xf32>
    %11 = tpu.matmul %9, %10, %cst_8 {dimension_numbers = #tpu.dot_dimension_numbers<[1], [0], [0], [1], [0, 0, 1, 1], [], []>} : vector<16x128xbf16>, vector<128x128xbf16>, vector<16x128xf32> -> vector<16x128xf32>
    %c0_9 = arith.constant 0 : index
    %c0_10 = arith.constant 0 : index
    %12 = vector.load %arg5[%c0_9, %c0_10] : memref<1x128xf32, #tpu.memory_space<vmem>>, vector<1x128xf32>
    %13 = vector.broadcast %12 : vector<1x128xf32> to vector<16x128xf32>
    %14 = arith.addf %11, %13 : vector<16x128xf32>
    %cst_11 = arith.constant 0.000000e+00 : f32
    %15 = vector.broadcast %cst_11 : f32 to vector<16x128xf32>
    %16 = arith.maximumf %14, %15 : vector<16x128xf32>
    %17 = arith.truncf %16 : vector<16x128xf32> to vector<16x128xbf16>
    %c0_12 = arith.constant 0 : index
    %c0_13 = arith.constant 0 : index
    %18 = vector.load %arg6[%c0_12, %c0_13] : memref<128x128xbf16, #tpu.memory_space<vmem>>, vector<128x128xbf16>
    %cst_14 = arith.constant dense<0.000000e+00> : vector<16x128xf32>
    %19 = tpu.matmul %17, %18, %cst_14 {dimension_numbers = #tpu.dot_dimension_numbers<[1], [0], [0], [1], [0, 0, 1, 1], [], []>} : vector<16x128xbf16>, vector<128x128xbf16>, vector<16x128xf32> -> vector<16x128xf32>
    %c0_15 = arith.constant 0 : index
    %c0_16 = arith.constant 0 : index
    %20 = vector.load %arg7[%c0_15, %c0_16] : memref<1x128xf32, #tpu.memory_space<vmem>>, vector<1x128xf32>
    %21 = vector.broadcast %20 : vector<1x128xf32> to vector<16x128xf32>
    %22 = arith.addf %19, %21 : vector<16x128xf32>
    %c0_17 = arith.constant 0 : index
    %c0_18 = arith.constant 0 : index
    %23 = vector.load %arg8[%c0_17, %c0_18] : memref<16x128xf32, #tpu.memory_space<vmem>>, vector<16x128xf32>
    tpu.vector_store %arg8[%c0_17, %c0_18], %22 {strides = array<i32>} : memref<16x128xf32, #tpu.memory_space<vmem>>, vector<16x128xf32>,
    return
  }
  func.func @transform_0(%arg0: i32) -> (i32, i32) {
    %c0_i32 = arith.constant 0 : i32
    %c0_i32_0 = arith.constant 0 : i32
    return %arg0, %c0_i32 : i32, i32
  }
  func.func @transform_1(%arg0: i32) -> (i32, i32) {
    %c0_i32 = arith.constant 0 : i32
    %c0_i32_0 = arith.constant 0 : i32
    %c0_i32_1 = arith.constant 0 : i32
    return %c0_i32, %c0_i32_0 : i32, i32
  }
  func.func @transform_2(%arg0: i32) -> (i32, i32) {
    %c0_i32 = arith.constant 0 : i32
    %c0_i32_0 = arith.constant 0 : i32
    %c0_i32_1 = arith.constant 0 : i32
    return %c0_i32, %c0_i32_0 : i32, i32
  }
  func.func @transform_3(%arg0: i32) -> (i32, i32) {
    %c0_i32 = arith.constant 0 : i32
    %c0_i32_0 = arith.constant 0 : i32
    %c0_i32_1 = arith.constant 0 : i32
    return %c0_i32, %c0_i32_0 : i32, i32
  }
  func.func @transform_4(%arg0: i32) -> (i32, i32) {
    %c0_i32 = arith.constant 0 : i32
    %c0_i32_0 = arith.constant 0 : i32
    %c0_i32_1 = arith.constant 0 : i32
    return %c0_i32, %c0_i32_0 : i32, i32
  }
  func.func @transform_5(%arg0: i32) -> (i32, i32) {
    %c0_i32 = arith.constant 0 : i32
    %c0_i32_0 = arith.constant 0 : i32
    %c0_i32_1 = arith.constant 0 : i32
    return %c0_i32, %c0_i32_0 : i32, i32
  }
  func.func @transform_6(%arg0: i32) -> (i32, i32) {
    %c0_i32 = arith.constant 0 : i32
    %c0_i32_0 = arith.constant 0 : i32
    %c0_i32_1 = arith.constant 0 : i32
    return %c0_i32, %c0_i32_0 : i32, i32
  }
  func.func @transform_7(%arg0: i32) -> (i32, i32) {
    %c0_i32 = arith.constant 0 : i32
    %c0_i32_0 = arith.constant 0 : i32
    return %arg0, %c0_i32 : i32, i32
  }
}

module attributes {stable_mosaic.version = 11 : i64} {
  func.func @twonn_kernel(%arg0: i32, %arg1: memref<16x1024xf32, #tpu.memory_space<vmem>>, %arg2: memref<1024x128xbf16, #tpu.memory_space<vmem>>, %arg3: memref<1x128xf32, #tpu.memory_space<vmem>>, %arg4: memref<128x128xbf16, #tpu.memory_space<vmem>>, %arg5: memref<1x128xf32, #tpu.memory_space<vmem>>, %arg6: memref<128x128xbf16, #tpu.memory_space<vmem>>, %arg7: memref<1x128xf32, #tpu.memory_space<vmem>>, %arg8: memref<16x128xf32, #tpu.memory_space<vmem>>) attributes {dimension_semantics = [#tpu.dimension_semantics<parallel>], iteration_bounds = array<i64: 1>, scalar_prefetch = 0 : i64, scratch_operands = 0 : i64, tpu.core_type = #tpu.core_type<tc>, window_params = [{transform_indices = @transform_0, window_bounds = array<i64: 16, 1024>}, {pipeline_mode = #tpu.pipeline_mode<synchronous>, transform_indices = @transform_1, window_bounds = array<i64: 1024, 128>}, {pipeline_mode = #tpu.pipeline_mode<synchronous>, transform_indices = @transform_2, window_bounds = array<i64: 1, 128>}, {pipeline_mode = #tpu.pipeline_mode<synchronous>, transform_indices = @transform_3, window_bounds = array<i64: 128, 128>}, {pipeline_mode = #tpu.pipeline_mode<synchronous>, transform_indices = @transform_4, window_bounds = array<i64: 1, 128>}, {pipeline_mode = #tpu.pipeline_mode<synchronous>, transform_indices = @transform_5, window_bounds = array<i64: 128, 128>}, {pipeline_mode = #tpu.pipeline_mode<synchronous>, transform_indices = @transform_6, window_bounds = array<i64: 1, 128>}, {transform_indices = @transform_7, window_bounds = array<i64: 16, 128>}]} {
    %c0 = arith.constant 0 : index
    %c0_0 = arith.constant 0 : index
    %0 = vector.load %arg1[%c0, %c0_0] : memref<16x1024xf32, #tpu.memory_space<vmem>>, vector<16x1024xf32>
    %1 = arith.truncf %0 : vector<16x1024xf32> to vector<16x1024xbf16>
    %c0_1 = arith.constant 0 : index
    %c0_2 = arith.constant 0 : index
    %2 = vector.load %arg2[%c0_1, %c0_2] : memref<1024x128xbf16, #tpu.memory_space<vmem>>, vector<1024x128xbf16>
    %cst = arith.constant dense<0.000000e+00> : vector<16x128xf32>
    %3 = tpu.matmul %1, %2, %cst {dimension_numbers = #tpu.dot_dimension_numbers<[1], [0], [0], [1], [0, 0, 1, 1], [], []>} : vector<16x1024xbf16>, vector<1024x128xbf16>, vector<16x128xf32> -> vector<16x128xf32>
    %c0_3 = arith.constant 0 : index
    %c0_4 = arith.constant 0 : index
    %4 = vector.load %arg3[%c0_3, %c0_4] : memref<1x128xf32, #tpu.memory_space<vmem>>, vector<1x128xf32>
    %5 = vector.broadcast %4 : vector<1x128xf32> to vector<16x128xf32>
    %6 = arith.addf %3, %5 : vector<16x128xf32>
    %cst_5 = arith.constant 0.000000e+00 : f32
    %7 = vector.broadcast %cst_5 : f32 to vector<16x128xf32>
    %8 = arith.maximumf %6, %7 : vector<16x128xf32>
    %9 = arith.truncf %8 : vector<16x128xf32> to vector<16x128xbf16>
    %c0_6 = arith.constant 0 : index
    %c0_7 = arith.constant 0 : index
    %10 = vector.load %arg4[%c0_6, %c0_7] : memref<128x128xbf16, #tpu.memory_space<vmem>>, vector<128x128xbf16>
    %cst_8 = arith.constant dense<0.000000e+00> : vector<16x128xf32>
    %11 = tpu.matmul %9, %10, %cst_8 {dimension_numbers = #tpu.dot_dimension_numbers<[1], [0], [0], [1], [0, 0, 1, 1], [], []>} : vector<16x128xbf16>, vector<128x128xbf16>, vector<16x128xf32> -> vector<16x128xf32>
    %c0_9 = arith.constant 0 : index
    %c0_10 = arith.constant 0 : index
    %12 = vector.load %arg5[%c0_9, %c0_10] : memref<1x128xf32, #tpu.memory_space<vmem>>, vector<1x128xf32>
    %13 = vector.broadcast %12 : vector<1x128xf32> to vector<16x128xf32>
    %14 = arith.addf %11, %13 : vector<16x128xf32>
    %cst_11 = arith.constant 0.000000e+00 : f32
    %15 = vector.broadcast %cst_11 : f32 to vector<16x128xf32>
    %16 = arith.maximumf %14, %15 : vector<16x128xf32>
    %17 = arith.truncf %16 : vector<16x128xf32> to vector<16x128xbf16>
    %c0_12 = arith.constant 0 : index
    %c0_13 = arith.constant 0 : index
    %18 = vector.load %arg6[%c0_12, %c0_13] : memref<128x128xbf16, #tpu.memory_space<vmem>>, vector<128x128xbf16>
    %cst_14 = arith.constant dense<0.000000e+00> : vector<16x128xf32>
    %19 = tpu.matmul %17, %18, %cst_14 {dimension_numbers = #tpu.dot_dimension_numbers<[1], [0], [0], [1], [0, 0, 1, 1], [], []>} : vector<16x128xbf16>, vector<128x128xbf16>, vector<16x128xf32> -> vector<16x128xf32>
    %c0_15 = arith.constant 0 : index
    %c0_16 = arith.constant 0 : index
    %20 = vector.load %arg7[%c0_15, %c0_16] : memref<1x128xf32, #tpu.memory_space<vmem>>, vector<1x128xf32>
    %21 = vector.broadcast %20 : vector<1x128xf32> to vector<16x128xf32>
    %22 = arith.addf %19, %21 : vector<16x128xf32>
    %c0_17 = arith.constant 0 : index
    %c0_18 = arith.constant 0 : index
    %23 = vector.load %arg8[%c0_17, %c0_18] : memref<16x128xf32, #tpu.memory_space<vmem>>, vector<16x128xf32>
    tpu.vector_store %arg8[%c0_17, %c0_18], %22 {strides = array<i32>} : memref<16x128xf32, #tpu.memory_space<vmem>>, vector<16x128xf32>,
    return
  }
  func.func @transform_0(%arg0: i32) -> (i32, i32) {
    %c0_i32 = arith.constant 0 : i32
    %c0_i32_0 = arith.constant 0 : i32
    return %arg0, %c0_i32 : i32, i32
  }
  func.func @transform_1(%arg0: i32) -> (i32, i32) {
    %c0_i32 = arith.constant 0 : i32
    %c0_i32_0 = arith.constant 0 : i32
    %c0_i32_1 = arith.constant 0 : i32
    return %c0_i32, %c0_i32_0 : i32, i32
  }
  func.func @transform_2(%arg0: i32) -> (i32, i32) {
    %c0_i32 = arith.constant 0 : i32
    %c0_i32_0 = arith.constant 0 : i32
    %c0_i32_1 = arith.constant 0 : i32
    return %c0_i32, %c0_i32_0 : i32, i32
  }
  func.func @transform_3(%arg0: i32) -> (i32, i32) {
    %c0_i32 = arith.constant 0 : i32
    %c0_i32_0 = arith.constant 0 : i32
    %c0_i32_1 = arith.constant 0 : i32
    return %c0_i32, %c0_i32_0 : i32, i32
  }
  func.func @transform_4(%arg0: i32) -> (i32, i32) {
    %c0_i32 = arith.constant 0 : i32
    %c0_i32_0 = arith.constant 0 : i32
    %c0_i32_1 = arith.constant 0 : i32
    return %c0_i32, %c0_i32_0 : i32, i32
  }
  func.func @transform_5(%arg0: i32) -> (i32, i32) {
    %c0_i32 = arith.constant 0 : i32
    %c0_i32_0 = arith.constant 0 : i32
    %c0_i32_1 = arith.constant 0 : i32
    return %c0_i32, %c0_i32_0 : i32, i32
  }
  func.func @transform_6(%arg0: i32) -> (i32, i32) {
    %c0_i32 = arith.constant 0 : i32
    %c0_i32_0 = arith.constant 0 : i32
    %c0_i32_1 = arith.constant 0 : i32
    return %c0_i32, %c0_i32_0 : i32, i32
  }
  func.func @transform_7(%arg0: i32) -> (i32, i32) {
    %c0_i32 = arith.constant 0 : i32
    %c0_i32_0 = arith.constant 0 : i32
    return %arg0, %c0_i32 : i32, i32
  }
}

</mosaic_0001>

<llo_original>
// kernel: _twonn_forward.1
$region0: #{_twonn_forward.1}
  #allocation0 [shape = 'u32[]', space=smem, size = 0x4, offset = 0x4, fixed_abs, tag = 'smem constant byte address 0x4 - core index']
  #allocation1 [shape = 'u32[144,128]{1,0:T(1,128)}', space=vmem, size = 0x12000, scoped, tag = 'internal scratch']
  %s0 = inlined_call_operand.vmem [shape: f32[16,1024], index: 0, kind: input, shape index: {}]
  %s1 = inlined_call_operand.hbm [shape: bf16[1024,128], index: 1, kind: input, shape index: {}]
  %s2 = inlined_call_operand.vmem [shape: f32[1,128], index: 2, kind: input, shape index: {}]
  %s3 = inlined_call_operand.vmem [shape: bf16[128,128], index: 3, kind: input, shape index: {}]
  %s4 = inlined_call_operand.vmem [shape: f32[1,128], index: 4, kind: input, shape index: {}]
  %s5 = inlined_call_operand.vmem [shape: bf16[128,128], index: 5, kind: input, shape index: {}]
  %s6 = inlined_call_operand.vmem [shape: f32[1,128], index: 6, kind: input, shape index: {}]
  %s7 = inlined_call_operand.vmem [shape: f32[16,128], index: 7, kind: output, shape index: {}]
  %s8 = sld [smem:[#allocation0]]
  $region42: #{_twonn_forward.1} parent=0
    _
  %s10 = ssub.s32 1, %s8
  %s11 = scalar_select 0, %s10, %s8
  $region1: #{_twonn_forward.1} parent=0
    #allocation2 [shape = 'u8[262144]{0}', space=vmem, size = 0x40000, scoped, tag = 'input window, operand 1, single buffered']
    #allocation3 [shape = 's32[1]{0}', space=sflag, size = 0x4, scoped, tag = 'scoped memory for _twonn_forward.1']
    %12 = vsyncpa [#allocation3], 0
    // Predicated region
    $region2: #{_twonn_forward.1} parent=1 // pred_check
      _
    $region3: #{_twonn_forward.1} parent=1 // pred_check_branch
      %14 = sbr.rel (0) target = $region5
    $region4: #{_twonn_forward.1} parent=1 // pred_region
      _
    $region5: #{_twonn_forward.1} parent=1 // pred_fallthru
      _
    // Predicated region
    $region6: #{_twonn_forward.1} parent=1 // pred_check
      _
    $region7: #{_twonn_forward.1} parent=1 // pred_check_branch
      %16 = sbr.rel (0) target = $region9
    $region8: #{_twonn_forward.1} parent=1 // pred_region
      %s18 = ssub.s32 8192, 8192
      %19 = vsyncadd [#allocation3], %s18
      %s20 = sshll.u32 [#allocation2], 4
      %s21 = int_to_ptr.vmem [resolvable:$true] %s20
      %26 = dma.hbm_to_vmem [thread:$0]  %s1, 8192, %s21, [#allocation3], 64, 64, 4
    $region9: #{_twonn_forward.1} parent=1 // pred_fallthru
      _
    // Predicated region
    $region10: #{_twonn_forward.1} parent=1 // pred_check
      _
    $region11: #{_twonn_forward.1} parent=1 // pred_check_branch
      %28 = sbr.rel (0) target = $region13
    $region12: #{_twonn_forward.1} parent=1 // pred_region
      _
    $region13: #{_twonn_forward.1} parent=1 // pred_fallthru
      _
    // Predicated region
    $region14: #{_twonn_forward.1} parent=1 // pred_check
      _
    $region15: #{_twonn_forward.1} parent=1 // pred_check_branch
      %30 = sbr.rel (0) target = $region17
    $region16: #{_twonn_forward.1} parent=1 // pred_region
      _
    $region17: #{_twonn_forward.1} parent=1 // pred_fallthru
      _
    // Predicated region
    $region18: #{_twonn_forward.1} parent=1 // pred_check
      _
    $region19: #{_twonn_forward.1} parent=1 // pred_check_branch
      %32 = sbr.rel (0) target = $region21
    $region20: #{_twonn_forward.1} parent=1 // pred_region
      _
    $region21: #{_twonn_forward.1} parent=1 // pred_fallthru
      _
    // Predicated region
    $region22: #{_twonn_forward.1} parent=1 // pred_check
      _
    $region23: #{_twonn_forward.1} parent=1 // pred_check_branch
      %34 = sbr.rel (0) target = $region25
    $region24: #{_twonn_forward.1} parent=1 // pred_region
      _
    $region25: #{_twonn_forward.1} parent=1 // pred_fallthru
      _
    // Predicated region
    $region26: #{_twonn_forward.1} parent=1 // pred_check
      _
    $region27: #{_twonn_forward.1} parent=1 // pred_check_branch
      %36 = sbr.rel (0) target = $region29
    $region28: #{_twonn_forward.1} parent=1 // pred_region
      _
    $region29: #{_twonn_forward.1} parent=1 // pred_fallthru
      _
    // Predicated region
    $region30: #{_twonn_forward.1} parent=1 // pred_check
      _
    $region31: #{_twonn_forward.1} parent=1 // pred_check_branch
      %38 = sbr.rel (0) target = $region33
    $region32: #{_twonn_forward.1} parent=1 // pred_region
      %39 = dma.done [#allocation3], 8192
    $region33: #{_twonn_forward.1} parent=1 // pred_fallthru
      _
    %v41 = vld [vmem:[%s0] sm:$0xff]
    %v42 = vld [vmem:[%s0 + $0x8] sm:$0xff]
    %v43 = vld [vmem:[%s0 + $0x10] sm:$0xff]
    %v44 = vld [vmem:[%s0 + $0x18] sm:$0xff]
    %v45 = vld [vmem:[%s0 + $0x20] sm:$0xff]
    %v46 = vld [vmem:[%s0 + $0x28] sm:$0xff]
    %v47 = vld [vmem:[%s0 + $0x30] sm:$0xff]
    %v48 = vld [vmem:[%s0 + $0x38] sm:$0xff]
    %v49 = vld [vmem:[%s0 + $0x40] sm:$0xff]
    %v50 = vld [vmem:[%s0 + $0x48] sm:$0xff]
    %v51 = vld [vmem:[%s0 + $0x50] sm:$0xff]
    %v52 = vld [vmem:[%s0 + $0x58] sm:$0xff]
    %v53 = vld [vmem:[%s0 + $0x60] sm:$0xff]
    %v54 = vld [vmem:[%s0 + $0x68] sm:$0xff]
    %v55 = vld [vmem:[%s0 + $0x70] sm:$0xff]
    %v56 = vld [vmem:[%s0 + $0x78] sm:$0xff]
    %v57 = vpack.c.bf16 %v49, %v41
    %v58 = vpack.c.bf16 %v50, %v42
    %v59 = vpack.c.bf16 %v51, %v43
    %v60 = vpack.c.bf16 %v52, %v44
    %v61 = vpack.c.bf16 %v53, %v45
    %v62 = vpack.c.bf16 %v54, %v46
    %v63 = vpack.c.bf16 %v55, %v47
    %v64 = vpack.c.bf16 %v56, %v48
    %v65 = vld [vmem:[#allocation2] sm:$0xf]
    %v66 = vld [vmem:[#allocation2 + $0x4] sm:$0xf]
    %v67 = vld [vmem:[#allocation2 + $0x8] sm:$0xf]
    %v68 = vld [vmem:[#allocation2 + $0xc] sm:$0xf]
    %v69 = vld [vmem:[#allocation2 + $0x10] sm:$0xf]
    %v70 = vld [vmem:[#allocation2 + $0x14] sm:$0xf]
    %v71 = vld [vmem:[#allocation2 + $0x18] sm:$0xf]
    %v72 = vld [vmem:[#allocation2 + $0x1c] sm:$0xf]
    %v73 = vld [vmem:[#allocation2 + $0x20] sm:$0xf]
    %v74 = vld [vmem:[#allocation2 + $0x24] sm:$0xf]
    %v75 = vld [vmem:[#allocation2 + $0x28] sm:$0xf]
    %v76 = vld [vmem:[#allocation2 + $0x2c] sm:$0xf]
    %v77 = vld [vmem:[#allocation2 + $0x30] sm:$0xf]
    %v78 = vld [vmem:[#allocation2 + $0x34] sm:$0xf]
    %v79 = vld [vmem:[#allocation2 + $0x38] sm:$0xf]
    %v80 = vld [vmem:[#allocation2 + $0x3c] sm:$0xf]
    %v81 = vld [vmem:[#allocation2 + $0x40] sm:$0xf]
    %v82 = vld [vmem:[#allocation2 + $0x44] sm:$0xf]
    %v83 = vld [vmem:[#allocation2 + $0x48] sm:$0xf]
    %v84 = vld [vmem:[#allocation2 + $0x4c] sm:$0xf]
    %v85 = vld [vmem:[#allocation2 + $0x50] sm:$0xf]
    %v86 = vld [vmem:[#allocation2 + $0x54] sm:$0xf]
    %v87 = vld [vmem:[#allocation2 + $0x58] sm:$0xf]
    %v88 = vld [vmem:[#allocation2 + $0x5c] sm:$0xf]
    %v89 = vld [vmem:[#allocation2 + $0x60] sm:$0xf]
    %v90 = vld [vmem:[#allocation2 + $0x64] sm:$0xf]
    %v91 = vld [vmem:[#allocation2 + $0x68] sm:$0xf]
    %v92 = vld [vmem:[#allocation2 + $0x6c] sm:$0xf]
    %v93 = vld [vmem:[#allocation2 + $0x70] sm:$0xf]
    %v94 = vld [vmem:[#allocation2 + $0x74] sm:$0xf]
    %v95 = vld [vmem:[#allocation2 + $0x78] sm:$0xf]
    %v96 = vld [vmem:[#allocation2 + $0x7c] sm:$0xf]
    %v97 = vld [vmem:[#allocation2 + $0x80] sm:$0xf]
    %v98 = vld [vmem:[#allocation2 + $0x84] sm:$0xf]
    %v99 = vld [vmem:[#allocation2 + $0x88] sm:$0xf]
    %v100 = vld [vmem:[#allocation2 + $0x8c] sm:$0xf]
    %v101 = vld [vmem:[#allocation2 + $0x90] sm:$0xf]
    %v102 = vld [vmem:[#allocation2 + $0x94] sm:$0xf]
    %v103 = vld [vmem:[#allocation2 + $0x98] sm:$0xf]
    %v104 = vld [vmem:[#allocation2 + $0x9c] sm:$0xf]
    %v105 = vld [vmem:[#allocation2 + $0xa0] sm:$0xf]
    %v106 = vld [vmem:[#allocation2 + $0xa4] sm:$0xf]
    %v107 = vld [vmem:[#allocation2 + $0xa8] sm:$0xf]
    %v108 = vld [vmem:[#allocation2 + $0xac] sm:$0xf]
    %v109 = vld [vmem:[#allocation2 + $0xb0] sm:$0xf]
    %v110 = vld [vmem:[#allocation2 + $0xb4] sm:$0xf]
    %v111 = vld [vmem:[#allocation2 + $0xb8] sm:$0xf]
    %v112 = vld [vmem:[#allocation2 + $0xbc] sm:$0xf]
    %v113 = vld [vmem:[#allocation2 + $0xc0] sm:$0xf]
    %v114 = vld [vmem:[#allocation2 + $0xc4] sm:$0xf]
    %v115 = vld [vmem:[#allocation2 + $0xc8] sm:$0xf]
    %v116 = vld [vmem:[#allocation2 + $0xcc] sm:$0xf]
    %v117 = vld [vmem:[#allocation2 + $0xd0] sm:$0xf]
    %v118 = vld [vmem:[#allocation2 + $0xd4] sm:$0xf]
    %v119 = vld [vmem:[#allocation2 + $0xd8] sm:$0xf]
    %v120 = vld [vmem:[#allocation2 + $0xdc] sm:$0xf]
    %v121 = vld [vmem:[#allocation2 + $0xe0] sm:$0xf]
    %v122 = vld [vmem:[#allocation2 + $0xe4] sm:$0xf]
    %v123 = vld [vmem:[#allocation2 + $0xe8] sm:$0xf]
    %v124 = vld [vmem:[#allocation2 + $0xec] sm:$0xf]
    %v125 = vld [vmem:[#allocation2 + $0xf0] sm:$0xf]
    %v126 = vld [vmem:[#allocation2 + $0xf4] sm:$0xf]
    %v127 = vld [vmem:[#allocation2 + $0xf8] sm:$0xf]
    %v128 = vld [vmem:[#allocation2 + $0xfc] sm:$0xf]
    %v129 = vld [vmem:[#allocation2 + $0x100] sm:$0xf]
    %v130 = vld [vmem:[#allocation2 + $0x104] sm:$0xf]
    %v131 = vld [vmem:[#allocation2 + $0x108] sm:$0xf]
    %v132 = vld [vmem:[#allocation2 + $0x10c] sm:$0xf]
    %v133 = vld [vmem:[#allocation2 + $0x110] sm:$0xf]
    %v134 = vld [vmem:[#allocation2 + $0x114] sm:$0xf]
    %v135 = vld [vmem:[#allocation2 + $0x118] sm:$0xf]
    %v136 = vld [vmem:[#allocation2 + $0x11c] sm:$0xf]
    %v137 = vld [vmem:[#allocation2 + $0x120] sm:$0xf]
    %v138 = vld [vmem:[#allocation2 + $0x124] sm:$0xf]
    %v139 = vld [vmem:[#allocation2 + $0x128] sm:$0xf]
    %v140 = vld [vmem:[#allocation2 + $0x12c] sm:$0xf]
    %v141 = vld [vmem:[#allocation2 + $0x130] sm:$0xf]
    %v142 = vld [vmem:[#allocation2 + $0x134] sm:$0xf]
    %v143 = vld [vmem:[#allocation2 + $0x138] sm:$0xf]
    %v144 = vld [vmem:[#allocation2 + $0x13c] sm:$0xf]
    %v145 = vld [vmem:[#allocation2 + $0x140] sm:$0xf]
    %v146 = vld [vmem:[#allocation2 + $0x144] sm:$0xf]
    %v147 = vld [vmem:[#allocation2 + $0x148] sm:$0xf]
    %v148 = vld [vmem:[#allocation2 + $0x14c] sm:$0xf]
    %v149 = vld [vmem:[#allocation2 + $0x150] sm:$0xf]
    %v150 = vld [vmem:[#allocation2 + $0x154] sm:$0xf]
    %v151 = vld [vmem:[#allocation2 + $0x158] sm:$0xf]
    %v152 = vld [vmem:[#allocation2 + $0x15c] sm:$0xf]
    %v153 = vld [vmem:[#allocation2 + $0x160] sm:$0xf]
    %v154 = vld [vmem:[#allocation2 + $0x164] sm:$0xf]
    %v155 = vld [vmem:[#allocation2 + $0x168] sm:$0xf]
    %v156 = vld [vmem:[#allocation2 + $0x16c] sm:$0xf]
    %v157 = vld [vmem:[#allocation2 + $0x170] sm:$0xf]
    %v158 = vld [vmem:[#allocation2 + $0x174] sm:$0xf]
    %v159 = vld [vmem:[#allocation2 + $0x178] sm:$0xf]
    %v160 = vld [vmem:[#allocation2 + $0x17c] sm:$0xf]
    %v161 = vld [vmem:[#allocation2 + $0x180] sm:$0xf]
    %v162 = vld [vmem:[#allocation2 + $0x184] sm:$0xf]
    %v163 = vld [vmem:[#allocation2 + $0x188] sm:$0xf]
    %v164 = vld [vmem:[#allocation2 + $0x18c] sm:$0xf]
    %v165 = vld [vmem:[#allocation2 + $0x190] sm:$0xf]
    %v166 = vld [vmem:[#allocation2 + $0x194] sm:$0xf]
    %v167 = vld [vmem:[#allocation2 + $0x198] sm:$0xf]
    %v168 = vld [vmem:[#allocation2 + $0x19c] sm:$0xf]
    %v169 = vld [vmem:[#allocation2 + $0x1a0] sm:$0xf]
    %v170 = vld [vmem:[#allocation2 + $0x1a4] sm:$0xf]
    %v171 = vld [vmem:[#allocation2 + $0x1a8] sm:$0xf]
    %v172 = vld [vmem:[#allocation2 + $0x1ac] sm:$0xf]
    %v173 = vld [vmem:[#allocation2 + $0x1b0] sm:$0xf]
    %v174 = vld [vmem:[#allocation2 + $0x1b4] sm:$0xf]
    %v175 = vld [vmem:[#allocation2 + $0x1b8] sm:$0xf]
    %v176 = vld [vmem:[#allocation2 + $0x1bc] sm:$0xf]
    %v177 = vld [vmem:[#allocation2 + $0x1c0] sm:$0xf]
    %v178 = vld [vmem:[#allocation2 + $0x1c4] sm:$0xf]
    %v179 = vld [vmem:[#allocation2 + $0x1c8] sm:$0xf]
    %v180 = vld [vmem:[#allocation2 + $0x1cc] sm:$0xf]
    %v181 = vld [vmem:[#allocation2 + $0x1d0] sm:$0xf]
    %v182 = vld [vmem:[#allocation2 + $0x1d4] sm:$0xf]
    %v183 = vld [vmem:[#allocation2 + $0x1d8] sm:$0xf]
    %v184 = vld [vmem:[#allocation2 + $0x1dc] sm:$0xf]
    %v185 = vld [vmem:[#allocation2 + $0x1e0] sm:$0xf]
    %v186 = vld [vmem:[#allocation2 + $0x1e4] sm:$0xf]
    %v187 = vld [vmem:[#allocation2 + $0x1e8] sm:$0xf]
    %v188 = vld [vmem:[#allocation2 + $0x1ec] sm:$0xf]
    %v189 = vld [vmem:[#allocation2 + $0x1f0] sm:$0xf]
    %v190 = vld [vmem:[#allocation2 + $0x1f4] sm:$0xf]
    %v191 = vld [vmem:[#allocation2 + $0x1f8] sm:$0xf]
    %v192 = vld [vmem:[#allocation2 + $0x1fc] sm:$0xf]
    %v193 = vld [vmem:[%s2] sm:$0x1]
    %v195 = vlaneseq
    %v196 = vshrl.u32 %v195, 7
    %v197 = vsub.s32 0, %v196
    %v198 = vrot.slane %v193, %v197
    %v328 = vunpack.c.l.b16 %v65
    %v329 = vunpack.c.l.b16 %v66
    %v330 = vunpack.c.l.b16 %v67
    %v331 = vunpack.c.l.b16 %v68
    %v332 = vunpack.c.l.b16 %v69
    %v333 = vunpack.c.l.b16 %v70
    %v334 = vunpack.c.l.b16 %v71
    %v335 = vunpack.c.l.b16 %v72
    %v336 = vunpack.c.l.b16 %v73
    %v337 = vunpack.c.l.b16 %v74
    %v338 = vunpack.c.l.b16 %v75
    %v339 = vunpack.c.l.b16 %v76
    %v340 = vunpack.c.l.b16 %v77
    %v341 = vunpack.c.l.b16 %v78
    %v342 = vunpack.c.l.b16 %v79
    %v343 = vunpack.c.l.b16 %v80
    %v344 = vunpack.c.l.b16 %v81
    %v345 = vunpack.c.l.b16 %v82
    %v346 = vunpack.c.l.b16 %v83
    %v347 = vunpack.c.l.b16 %v84
    %v348 = vunpack.c.l.b16 %v85
    %v349 = vunpack.c.l.b16 %v86
    %v350 = vunpack.c.l.b16 %v87
    %v351 = vunpack.c.l.b16 %v88
    %v352 = vunpack.c.l.b16 %v89
    %v353 = vunpack.c.l.b16 %v90
    %v354 = vunpack.c.l.b16 %v91
    %v355 = vunpack.c.l.b16 %v92
    %v356 = vunpack.c.l.b16 %v93
    %v357 = vunpack.c.l.b16 %v94
    %v358 = vunpack.c.l.b16 %v95
    %v359 = vunpack.c.l.b16 %v96
    %v360 = vunpack.c.l.b16 %v97
    %v361 = vunpack.c.l.b16 %v98
    %v362 = vunpack.c.l.b16 %v99
    %v363 = vunpack.c.l.b16 %v100
    %v364 = vunpack.c.l.b16 %v101
    %v365 = vunpack.c.l.b16 %v102
    %v366 = vunpack.c.l.b16 %v103
    %v367 = vunpack.c.l.b16 %v104
    %v368 = vunpack.c.l.b16 %v105
    %v369 = vunpack.c.l.b16 %v106
    %v370 = vunpack.c.l.b16 %v107
    %v371 = vunpack.c.l.b16 %v108
    %v372 = vunpack.c.l.b16 %v109
    %v373 = vunpack.c.l.b16 %v110
    %v374 = vunpack.c.l.b16 %v111
    %v375 = vunpack.c.l.b16 %v112
    %v376 = vunpack.c.l.b16 %v113
    %v377 = vunpack.c.l.b16 %v114
    %v378 = vunpack.c.l.b16 %v115
    %v379 = vunpack.c.l.b16 %v116
    %v380 = vunpack.c.l.b16 %v117
    %v381 = vunpack.c.l.b16 %v118
    %v382 = vunpack.c.l.b16 %v119
    %v383 = vunpack.c.l.b16 %v120
    %v384 = vunpack.c.l.b16 %v121
    %v385 = vunpack.c.l.b16 %v122
    %v386 = vunpack.c.l.b16 %v123
    %v387 = vunpack.c.l.b16 %v124
    %v388 = vunpack.c.l.b16 %v125
    %v389 = vunpack.c.l.b16 %v126
    %v390 = vunpack.c.l.b16 %v127
    %v391 = vunpack.c.l.b16 %v128
    %v392 = vunpack.c.l.b16 %v129
    %v393 = vunpack.c.l.b16 %v130
    %v394 = vunpack.c.l.b16 %v131
    %v395 = vunpack.c.l.b16 %v132
    %v396 = vunpack.c.l.b16 %v133
    %v397 = vunpack.c.l.b16 %v134
    %v398 = vunpack.c.l.b16 %v135
    %v399 = vunpack.c.l.b16 %v136
    %v400 = vunpack.c.l.b16 %v137
    %v401 = vunpack.c.l.b16 %v138
    %v402 = vunpack.c.l.b16 %v139
    %v403 = vunpack.c.l.b16 %v140
    %v404 = vunpack.c.l.b16 %v141
    %v405 = vunpack.c.l.b16 %v142
    %v406 = vunpack.c.l.b16 %v143
    %v407 = vunpack.c.l.b16 %v144
    %v408 = vunpack.c.l.b16 %v145
    %v409 = vunpack.c.l.b16 %v146
    %v410 = vunpack.c.l.b16 %v147
    %v411 = vunpack.c.l.b16 %v148
    %v412 = vunpack.c.l.b16 %v149
    %v413 = vunpack.c.l.b16 %v150
    %v414 = vunpack.c.l.b16 %v151
    %v415 = vunpack.c.l.b16 %v152
    %v416 = vunpack.c.l.b16 %v153
    %v417 = vunpack.c.l.b16 %v154
    %v418 = vunpack.c.l.b16 %v155
    %v419 = vunpack.c.l.b16 %v156
    %v420 = vunpack.c.l.b16 %v157
    %v421 = vunpack.c.l.b16 %v158
    %v422 = vunpack.c.l.b16 %v159
    %v423 = vunpack.c.l.b16 %v160
    %v424 = vunpack.c.l.b16 %v161
    %v425 = vunpack.c.l.b16 %v162
    %v426 = vunpack.c.l.b16 %v163
    %v427 = vunpack.c.l.b16 %v164
    %v428 = vunpack.c.l.b16 %v165
    %v429 = vunpack.c.l.b16 %v166
    %v430 = vunpack.c.l.b16 %v167
    %v431 = vunpack.c.l.b16 %v168
    %v432 = vunpack.c.l.b16 %v169
    %v433 = vunpack.c.l.b16 %v170
    %v434 = vunpack.c.l.b16 %v171
    %v435 = vunpack.c.l.b16 %v172
    %v436 = vunpack.c.l.b16 %v173
    %v437 = vunpack.c.l.b16 %v174
    %v438 = vunpack.c.l.b16 %v175
    %v439 = vunpack.c.l.b16 %v176
    %v440 = vunpack.c.l.b16 %v177
    %v441 = vunpack.c.l.b16 %v178
    %v442 = vunpack.c.l.b16 %v179
    %v443 = vunpack.c.l.b16 %v180
    %v444 = vunpack.c.l.b16 %v181
    %v445 = vunpack.c.l.b16 %v182
    %v446 = vunpack.c.l.b16 %v183
    %v447 = vunpack.c.l.b16 %v184
    %v448 = vunpack.c.l.b16 %v185
    %v449 = vunpack.c.l.b16 %v186
    %v450 = vunpack.c.l.b16 %v187
    %v451 = vunpack.c.l.b16 %v188
    %v452 = vunpack.c.l.b16 %v189
    %v453 = vunpack.c.l.b16 %v190
    %v454 = vunpack.c.l.b16 %v191
    %v455 = vunpack.c.l.b16 %v192
    %v456 = vpack.c.b16 %v329, %v328
    %v457 = vpack.c.b16 %v331, %v330
    %v458 = vpack.c.b16 %v333, %v332
    %v459 = vpack.c.b16 %v335, %v334
    %v460 = vpack.c.b16 %v337, %v336
    %v461 = vpack.c.b16 %v339, %v338
    %v462 = vpack.c.b16 %v341, %v340
    %v463 = vpack.c.b16 %v343, %v342
    %v464 = vpack.c.b16 %v345, %v344
    %v465 = vpack.c.b16 %v347, %v346
    %v466 = vpack.c.b16 %v349, %v348
    %v467 = vpack.c.b16 %v351, %v350
    %v468 = vpack.c.b16 %v353, %v352
    %v469 = vpack.c.b16 %v355, %v354
    %v470 = vpack.c.b16 %v357, %v356
    %v471 = vpack.c.b16 %v359, %v358
    %v472 = vpack.c.b16 %v361, %v360
    %v473 = vpack.c.b16 %v363, %v362
    %v474 = vpack.c.b16 %v365, %v364
    %v475 = vpack.c.b16 %v367, %v366
    %v476 = vpack.c.b16 %v369, %v368
    %v477 = vpack.c.b16 %v371, %v370
    %v478 = vpack.c.b16 %v373, %v372
    %v479 = vpack.c.b16 %v375, %v374
    %v480 = vpack.c.b16 %v377, %v376
    %v481 = vpack.c.b16 %v379, %v378
    %v482 = vpack.c.b16 %v381, %v380
    %v483 = vpack.c.b16 %v383, %v382
    %v484 = vpack.c.b16 %v385, %v384
    %v485 = vpack.c.b16 %v387, %v386
    %v486 = vpack.c.b16 %v389, %v388
    %v487 = vpack.c.b16 %v391, %v390
    %v488 = vpack.c.b16 %v393, %v392
    %v489 = vpack.c.b16 %v395, %v394
    %v490 = vpack.c.b16 %v397, %v396
    %v491 = vpack.c.b16 %v399, %v398
    %v492 = vpack.c.b16 %v401, %v400
    %v493 = vpack.c.b16 %v403, %v402
    %v494 = vpack.c.b16 %v405, %v404
    %v495 = vpack.c.b16 %v407, %v406
    %v496 = vpack.c.b16 %v409, %v408
    %v497 = vpack.c.b16 %v411, %v410
    %v498 = vpack.c.b16 %v413, %v412
    %v499 = vpack.c.b16 %v415, %v414
    %v500 = vpack.c.b16 %v417, %v416
    %v501 = vpack.c.b16 %v419, %v418
    %v502 = vpack.c.b16 %v421, %v420
    %v503 = vpack.c.b16 %v423, %v422
    %v504 = vpack.c.b16 %v425, %v424
    %v505 = vpack.c.b16 %v427, %v426
    %v506 = vpack.c.b16 %v429, %v428
    %v507 = vpack.c.b16 %v431, %v430
    %v508 = vpack.c.b16 %v433, %v432
    %v509 = vpack.c.b16 %v435, %v434
    %v510 = vpack.c.b16 %v437, %v436
    %v511 = vpack.c.b16 %v439, %v438
    %v512 = vpack.c.b16 %v441, %v440
    %v513 = vpack.c.b16 %v443, %v442
    %v514 = vpack.c.b16 %v445, %v444
    %v515 = vpack.c.b16 %v447, %v446
    %v516 = vpack.c.b16 %v449, %v448
    %v517 = vpack.c.b16 %v451, %v450
    %v518 = vpack.c.b16 %v453, %v452
    %v519 = vpack.c.b16 %v455, %v454
    %584 = vmatprep.subr.bf16.mxu0 0
    %585 = vmatpush1.bf16.msra.mxu0 %v456
    %586 = vmatprep.subr.bf16.mxu0 0
    %587 = vmatpush1.bf16.msra.mxu0 %v457
    %588 = vmatprep.subr.bf16.mxu0 0
    %589 = vmatpush1.bf16.msra.mxu0 %v458
    %590 = vmatprep.subr.bf16.mxu0 0
    %591 = vmatpush1.bf16.msra.mxu0 %v459
    %592 = vmatprep.subr.bf16.mxu0 0
    %593 = vmatpush1.bf16.msra.mxu0 %v460
    %594 = vmatprep.subr.bf16.mxu0 0
    %595 = vmatpush1.bf16.msra.mxu0 %v461
    %596 = vmatprep.subr.bf16.mxu0 0
    %597 = vmatpush1.bf16.msra.mxu0 %v462
    %598 = vmatprep.subr.bf16.mxu0 0
    %599 = vmatpush1.bf16.msra.mxu0 %v463
    %600 = vmatprep.subr.bf16.mxu0 0
    %601 = vmatpush1.bf16.msra.mxu0 %v464
    %602 = vmatprep.subr.bf16.mxu0 0
    %603 = vmatpush1.bf16.msra.mxu0 %v465
    %604 = vmatprep.subr.bf16.mxu0 0
    %605 = vmatpush1.bf16.msra.mxu0 %v466
    %606 = vmatprep.subr.bf16.mxu0 0
    %607 = vmatpush1.bf16.msra.mxu0 %v467
    %608 = vmatprep.subr.bf16.mxu0 0
    %609 = vmatpush1.bf16.msra.mxu0 %v468
    %610 = vmatprep.subr.bf16.mxu0 0
    %611 = vmatpush1.bf16.msra.mxu0 %v469
    %612 = vmatprep.subr.bf16.mxu0 0
    %613 = vmatpush1.bf16.msra.mxu0 %v470
    %614 = vmatprep.subr.bf16.mxu0 0
    %615 = vmatpush1.bf16.msra.mxu0 %v471
    %616 = vmatprep.mubr.bf16.mxu0 %v58
    %617 = vmatmul.mubr.bf16.gmra.mrb[0].mxu0 %v57
    %v618 = vpop.f32.mrb[0].mxu0
    %v619 = vadd.f32 %v198, %v618
    %v620 = vpop.f32.mrb[0].mxu0
    %v621 = vpop.f32.mrb[0].mxu0
    %v622 = vadd.f32 %v198, %v621
    %v623 = vpop.f32.mrb[0].mxu0
    %624 = vdwg.mxu0
    %625 = vmatprep.subr.bf16.mxu0 0
    %626 = vmatpush1.bf16.msra.mxu0 %v472
    %627 = vmatprep.subr.bf16.mxu0 0
    %628 = vmatpush1.bf16.msra.mxu0 %v473
    %629 = vmatprep.subr.bf16.mxu0 0
    %630 = vmatpush1.bf16.msra.mxu0 %v474
    %631 = vmatprep.subr.bf16.mxu0 0
    %632 = vmatpush1.bf16.msra.mxu0 %v475
    %633 = vmatprep.subr.bf16.mxu0 0
    %634 = vmatpush1.bf16.msra.mxu0 %v476
    %635 = vmatprep.subr.bf16.mxu0 0
    %636 = vmatpush1.bf16.msra.mxu0 %v477
    %637 = vmatprep.subr.bf16.mxu0 0
    %638 = vmatpush1.bf16.msra.mxu0 %v478
    %639 = vmatprep.subr.bf16.mxu0 0
    %640 = vmatpush1.bf16.msra.mxu0 %v479
    %641 = vmatprep.subr.bf16.mxu0 0
    %642 = vmatpush1.bf16.msra.mxu0 %v480
    %643 = vmatprep.subr.bf16.mxu0 0
    %644 = vmatpush1.bf16.msra.mxu0 %v481
    %645 = vmatprep.subr.bf16.mxu0 0
    %646 = vmatpush1.bf16.msra.mxu0 %v482
    %647 = vmatprep.subr.bf16.mxu0 0
    %648 = vmatpush1.bf16.msra.mxu0 %v483
    %649 = vmatprep.subr.bf16.mxu0 0
    %650 = vmatpush1.bf16.msra.mxu0 %v484
    %651 = vmatprep.subr.bf16.mxu0 0
    %652 = vmatpush1.bf16.msra.mxu0 %v485
    %653 = vmatprep.subr.bf16.mxu0 0
    %654 = vmatpush1.bf16.msra.mxu0 %v486
    %655 = vmatprep.subr.bf16.mxu0 0
    %656 = vmatpush1.bf16.msra.mxu0 %v487
    %657 = vmatprep.mubr.bf16.mxu0 %v60
    %658 = vmatmul.mubr.bf16.gmra.mrb[0].mxu0 %v59
    %v659 = vpop.f32.mrb[0].mxu0
    %v660 = vadd.f32 %v619, %v659
    %v661 = vpop.f32.mrb[0].mxu0
    %v662 = vpop.f32.mrb[0].mxu0
    %v663 = vadd.f32 %v622, %v662
    %v664 = vpop.f32.mrb[0].mxu0
    %665 = vdwg.mxu0
    %666 = vmatprep.subr.bf16.mxu0 0
    %667 = vmatpush1.bf16.msra.mxu0 %v488
    %668 = vmatprep.subr.bf16.mxu0 0
    %669 = vmatpush1.bf16.msra.mxu0 %v489
    %670 = vmatprep.subr.bf16.mxu0 0
    %671 = vmatpush1.bf16.msra.mxu0 %v490
    %672 = vmatprep.subr.bf16.mxu0 0
    %673 = vmatpush1.bf16.msra.mxu0 %v491
    %674 = vmatprep.subr.bf16.mxu0 0
    %675 = vmatpush1.bf16.msra.mxu0 %v492
    %676 = vmatprep.subr.bf16.mxu0 0
    %677 = vmatpush1.bf16.msra.mxu0 %v493
    %678 = vmatprep.subr.bf16.mxu0 0
    %679 = vmatpush1.bf16.msra.mxu0 %v494
    %680 = vmatprep.subr.bf16.mxu0 0
    %681 = vmatpush1.bf16.msra.mxu0 %v495
    %682 = vmatprep.subr.bf16.mxu0 0
    %683 = vmatpush1.bf16.msra.mxu0 %v496
    %684 = vmatprep.subr.bf16.mxu0 0
    %685 = vmatpush1.bf16.msra.mxu0 %v497
    %686 = vmatprep.subr.bf16.mxu0 0
    %687 = vmatpush1.bf16.msra.mxu0 %v498
    %688 = vmatprep.subr.bf16.mxu0 0
    %689 = vmatpush1.bf16.msra.mxu0 %v499
    %690 = vmatprep.subr.bf16.mxu0 0
    %691 = vmatpush1.bf16.msra.mxu0 %v500
    %692 = vmatprep.subr.bf16.mxu0 0
    %693 = vmatpush1.bf16.msra.mxu0 %v501
    %694 = vmatprep.subr.bf16.mxu0 0
    %695 = vmatpush1.bf16.msra.mxu0 %v502
    %696 = vmatprep.subr.bf16.mxu0 0
    %697 = vmatpush1.bf16.msra.mxu0 %v503
    %698 = vmatprep.mubr.bf16.mxu0 %v62
    %699 = vmatmul.mubr.bf16.gmra.mrb[0].mxu0 %v61
    %v700 = vpop.f32.mrb[0].mxu0
    %v701 = vadd.f32 %v660, %v700
    %v702 = vpop.f32.mrb[0].mxu0
    %v703 = vpop.f32.mrb[0].mxu0
    %v704 = vadd.f32 %v663, %v703
    %v705 = vpop.f32.mrb[0].mxu0
    %706 = vdwg.mxu0
    %707 = vmatprep.subr.bf16.mxu0 0
    %708 = vmatpush1.bf16.msra.mxu0 %v504
    %709 = vmatprep.subr.bf16.mxu0 0
    %710 = vmatpush1.bf16.msra.mxu0 %v505
    %711 = vmatprep.subr.bf16.mxu0 0
    %712 = vmatpush1.bf16.msra.mxu0 %v506
    %713 = vmatprep.subr.bf16.mxu0 0
    %714 = vmatpush1.bf16.msra.mxu0 %v507
    %715 = vmatprep.subr.bf16.mxu0 0
    %716 = vmatpush1.bf16.msra.mxu0 %v508
    %717 = vmatprep.subr.bf16.mxu0 0
    %718 = vmatpush1.bf16.msra.mxu0 %v509
    %719 = vmatprep.subr.bf16.mxu0 0
    %720 = vmatpush1.bf16.msra.mxu0 %v510
    %721 = vmatprep.subr.bf16.mxu0 0
    %722 = vmatpush1.bf16.msra.mxu0 %v511
    %723 = vmatprep.subr.bf16.mxu0 0
    %724 = vmatpush1.bf16.msra.mxu0 %v512
    %725 = vmatprep.subr.bf16.mxu0 0
    %726 = vmatpush1.bf16.msra.mxu0 %v513
    %727 = vmatprep.subr.bf16.mxu0 0
    %728 = vmatpush1.bf16.msra.mxu0 %v514
    %729 = vmatprep.subr.bf16.mxu0 0
    %730 = vmatpush1.bf16.msra.mxu0 %v515
    %731 = vmatprep.subr.bf16.mxu0 0
    %732 = vmatpush1.bf16.msra.mxu0 %v516
    %733 = vmatprep.subr.bf16.mxu0 0
    %734 = vmatpush1.bf16.msra.mxu0 %v517
    %735 = vmatprep.subr.bf16.mxu0 0
    %736 = vmatpush1.bf16.msra.mxu0 %v518
    %737 = vmatprep.subr.bf16.mxu0 0
    %738 = vmatpush1.bf16.msra.mxu0 %v519
    %739 = vmatprep.mubr.bf16.mxu0 %v64
    %740 = vmatmul.mubr.bf16.gmra.mrb[0].mxu0 %v63
    %v741 = vpop.f32.mrb[0].mxu0
    %v742 = vadd.f32 %v701, %v741
    %v743 = vpop.f32.mrb[0].mxu0
    %v744 = vpop.f32.mrb[0].mxu0
    %v745 = vadd.f32 %v704, %v744
    %v746 = vpop.f32.mrb[0].mxu0
    %747 = vdwg.mxu0
    %v748 = vmax.f32 %v742, 0.0
    %v749 = vmax.f32 %v745, 0.0
    %v750 = vpack.c.bf16 %v749, %v748
    %v751 = vld [vmem:[%s3] sm:$0xf]
    %v752 = vld [vmem:[%s3 + $0x4] sm:$0xf]
    %v753 = vld [vmem:[%s3 + $0x8] sm:$0xf]
    %v754 = vld [vmem:[%s3 + $0xc] sm:$0xf]
    %v755 = vld [vmem:[%s3 + $0x10] sm:$0xf]
    %v756 = vld [vmem:[%s3 + $0x14] sm:$0xf]
    %v757 = vld [vmem:[%s3 + $0x18] sm:$0xf]
    %v758 = vld [vmem:[%s3 + $0x1c] sm:$0xf]
    %v759 = vld [vmem:[%s3 + $0x20] sm:$0xf]
    %v760 = vld [vmem:[%s3 + $0x24] sm:$0xf]
    %v761 = vld [vmem:[%s3 + $0x28] sm:$0xf]
    %v762 = vld [vmem:[%s3 + $0x2c] sm:$0xf]
    %v763 = vld [vmem:[%s3 + $0x30] sm:$0xf]
    %v764 = vld [vmem:[%s3 + $0x34] sm:$0xf]
    %v765 = vld [vmem:[%s3 + $0x38] sm:$0xf]
    %v766 = vld [vmem:[%s3 + $0x3c] sm:$0xf]
    %v767 = vld [vmem:[%s4] sm:$0x1]
    %v769 = vlaneseq
    %v770 = vshrl.u32 %v769, 7
    %v771 = vsub.s32 0, %v770
    %v772 = vrot.slane %v767, %v771
    %v790 = vunpack.c.l.b16 %v751
    %v791 = vunpack.c.l.b16 %v752
    %v792 = vunpack.c.l.b16 %v753
    %v793 = vunpack.c.l.b16 %v754
    %v794 = vunpack.c.l.b16 %v755
    %v795 = vunpack.c.l.b16 %v756
    %v796 = vunpack.c.l.b16 %v757
    %v797 = vunpack.c.l.b16 %v758
    %v798 = vunpack.c.l.b16 %v759
    %v799 = vunpack.c.l.b16 %v760
    %v800 = vunpack.c.l.b16 %v761
    %v801 = vunpack.c.l.b16 %v762
    %v802 = vunpack.c.l.b16 %v763
    %v803 = vunpack.c.l.b16 %v764
    %v804 = vunpack.c.l.b16 %v765
    %v805 = vunpack.c.l.b16 %v766
    %v806 = vpack.c.b16 %v791, %v790
    %v807 = vpack.c.b16 %v793, %v792
    %v808 = vpack.c.b16 %v795, %v794
    %v809 = vpack.c.b16 %v797, %v796
    %v810 = vpack.c.b16 %v799, %v798
    %v811 = vpack.c.b16 %v801, %v800
    %v812 = vpack.c.b16 %v803, %v802
    %v813 = vpack.c.b16 %v805, %v804
    %822 = vmatprep.subr.bf16.mxu0 0
    %823 = vmatpush1.bf16.msra.mxu0 %v806
    %824 = vmatprep.subr.bf16.mxu0 0
    %825 = vmatpush1.bf16.msra.mxu0 %v807
    %826 = vmatprep.subr.bf16.mxu0 0
    %827 = vmatpush1.bf16.msra.mxu0 %v808
    %828 = vmatprep.subr.bf16.mxu0 0
    %829 = vmatpush1.bf16.msra.mxu0 %v809
    %830 = vmatprep.subr.bf16.mxu0 0
    %831 = vmatpush1.bf16.msra.mxu0 %v810
    %832 = vmatprep.subr.bf16.mxu0 0
    %833 = vmatpush1.bf16.msra.mxu0 %v811
    %834 = vmatprep.subr.bf16.mxu0 0
    %835 = vmatpush1.bf16.msra.mxu0 %v812
    %836 = vmatprep.subr.bf16.mxu0 0
    %837 = vmatpush1.bf16.msra.mxu0 %v813
    %838 = vmatprep.subr.bf16.mxu0 0
    %839 = vmatpush1.bf16.msra.mxu0 0
    %840 = vmatprep.subr.bf16.mxu0 0
    %841 = vmatpush1.bf16.msra.mxu0 0
    %842 = vmatprep.subr.bf16.mxu0 0
    %843 = vmatpush1.bf16.msra.mxu0 0
    %844 = vmatprep.subr.bf16.mxu0 0
    %845 = vmatpush1.bf16.msra.mxu0 0
    %846 = vmatprep.subr.bf16.mxu0 0
    %847 = vmatpush1.bf16.msra.mxu0 0
    %848 = vmatprep.subr.bf16.mxu0 0
    %849 = vmatpush1.bf16.msra.mxu0 0
    %850 = vmatprep.subr.bf16.mxu0 0
    %851 = vmatpush1.bf16.msra.mxu0 0
    %852 = vmatprep.subr.bf16.mxu0 0
    %853 = vmatpush1.bf16.msra.mxu0 0
    %854 = vmatprep.mubr.bf16.mxu0 0
    %855 = vmatmul.mubr.bf16.gmra.mrb[0].mxu0 %v750
    %v856 = vpop.f32.mrb[0].mxu0
    %v857 = vadd.f32 %v772, %v856
    %v858 = vpop.f32.mrb[0].mxu0
    %v859 = vpop.f32.mrb[0].mxu0
    %v860 = vadd.f32 %v772, %v859
    %v861 = vpop.f32.mrb[0].mxu0
    %862 = vdwg.mxu0
    %v863 = vmax.f32 %v857, 0.0
    %v864 = vmax.f32 %v860, 0.0
    %v865 = vpack.c.bf16 %v864, %v863
    %v866 = vld [vmem:[%s5] sm:$0xf]
    %v867 = vld [vmem:[%s5 + $0x4] sm:$0xf]
    %v868 = vld [vmem:[%s5 + $0x8] sm:$0xf]
    %v869 = vld [vmem:[%s5 + $0xc] sm:$0xf]
    %v870 = vld [vmem:[%s5 + $0x10] sm:$0xf]
    %v871 = vld [vmem:[%s5 + $0x14] sm:$0xf]
    %v872 = vld [vmem:[%s5 + $0x18] sm:$0xf]
    %v873 = vld [vmem:[%s5 + $0x1c] sm:$0xf]
    %v874 = vld [vmem:[%s5 + $0x20] sm:$0xf]
    %v875 = vld [vmem:[%s5 + $0x24] sm:$0xf]
    %v876 = vld [vmem:[%s5 + $0x28] sm:$0xf]
    %v877 = vld [vmem:[%s5 + $0x2c] sm:$0xf]
    %v878 = vld [vmem:[%s5 + $0x30] sm:$0xf]
    %v879 = vld [vmem:[%s5 + $0x34] sm:$0xf]
    %v880 = vld [vmem:[%s5 + $0x38] sm:$0xf]
    %v881 = vld [vmem:[%s5 + $0x3c] sm:$0xf]
    %v882 = vld [vmem:[%s6] sm:$0x1]
    %v884 = vlaneseq
    %v885 = vshrl.u32 %v884, 7
    %v886 = vsub.s32 0, %v885
    %v887 = vrot.slane %v882, %v886
    %v905 = vunpack.c.l.b16 %v866
    %v906 = vunpack.c.l.b16 %v867
    %v907 = vunpack.c.l.b16 %v868
    %v908 = vunpack.c.l.b16 %v869
    %v909 = vunpack.c.l.b16 %v870
    %v910 = vunpack.c.l.b16 %v871
    %v911 = vunpack.c.l.b16 %v872
    %v912 = vunpack.c.l.b16 %v873
    %v913 = vunpack.c.l.b16 %v874
    %v914 = vunpack.c.l.b16 %v875
    %v915 = vunpack.c.l.b16 %v876
    %v916 = vunpack.c.l.b16 %v877
    %v917 = vunpack.c.l.b16 %v878
    %v918 = vunpack.c.l.b16 %v879
    %v919 = vunpack.c.l.b16 %v880
    %v920 = vunpack.c.l.b16 %v881
    %v921 = vpack.c.b16 %v906, %v905
    %v922 = vpack.c.b16 %v908, %v907
    %v923 = vpack.c.b16 %v910, %v909
    %v924 = vpack.c.b16 %v912, %v911
    %v925 = vpack.c.b16 %v914, %v913
    %v926 = vpack.c.b16 %v916, %v915
    %v927 = vpack.c.b16 %v918, %v917
    %v928 = vpack.c.b16 %v920, %v919
    %937 = vmatprep.subr.bf16.mxu0 0
    %938 = vmatpush1.bf16.msra.mxu0 %v921
    %939 = vmatprep.subr.bf16.mxu0 0
    %940 = vmatpush1.bf16.msra.mxu0 %v922
    %941 = vmatprep.subr.bf16.mxu0 0
    %942 = vmatpush1.bf16.msra.mxu0 %v923
    %943 = vmatprep.subr.bf16.mxu0 0
    %944 = vmatpush1.bf16.msra.mxu0 %v924
    %945 = vmatprep.subr.bf16.mxu0 0
    %946 = vmatpush1.bf16.msra.mxu0 %v925
    %947 = vmatprep.subr.bf16.mxu0 0
    %948 = vmatpush1.bf16.msra.mxu0 %v926
    %949 = vmatprep.subr.bf16.mxu0 0
    %950 = vmatpush1.bf16.msra.mxu0 %v927
    %951 = vmatprep.subr.bf16.mxu0 0
    %952 = vmatpush1.bf16.msra.mxu0 %v928
    %953 = vmatprep.subr.bf16.mxu0 0
    %954 = vmatpush1.bf16.msra.mxu0 0
    %955 = vmatprep.subr.bf16.mxu0 0
    %956 = vmatpush1.bf16.msra.mxu0 0
    %957 = vmatprep.subr.bf16.mxu0 0
    %958 = vmatpush1.bf16.msra.mxu0 0
    %959 = vmatprep.subr.bf16.mxu0 0
    %960 = vmatpush1.bf16.msra.mxu0 0
    %961 = vmatprep.subr.bf16.mxu0 0
    %962 = vmatpush1.bf16.msra.mxu0 0
    %963 = vmatprep.subr.bf16.mxu0 0
    %964 = vmatpush1.bf16.msra.mxu0 0
    %965 = vmatprep.subr.bf16.mxu0 0
    %966 = vmatpush1.bf16.msra.mxu0 0
    %967 = vmatprep.subr.bf16.mxu0 0
    %968 = vmatpush1.bf16.msra.mxu0 0
    %969 = vmatprep.mubr.bf16.mxu0 0
    %970 = vmatmul.mubr.bf16.gmra.mrb[0].mxu0 %v865
    %v971 = vpop.f32.mrb[0].mxu0
    %v972 = vadd.f32 %v887, %v971
    %v973 = vpop.f32.mrb[0].mxu0
    %v974 = vpop.f32.mrb[0].mxu0
    %v975 = vadd.f32 %v887, %v974
    %v976 = vpop.f32.mrb[0].mxu0
    %977 = vdwg.mxu0
    %978 = vst [vmem:[%s7] sm:$0xff] %v972
    %979 = vst [vmem:[%s7 + $0x8] sm:$0xff] %v975
    // Predicated region
    $region34: #{_twonn_forward.1} parent=1 // pred_check
      _
    $region35: #{_twonn_forward.1} parent=1 // pred_check_branch
      %981 = sbr.rel (0) target = $region37
    $region36: #{_twonn_forward.1} parent=1 // pred_region
      _
    $region37: #{_twonn_forward.1} parent=1 // pred_fallthru
      _
    // Predicated region
    $region38: #{_twonn_forward.1} parent=1 // pred_check
      _
    $region39: #{_twonn_forward.1} parent=1 // pred_check_branch
      %983 = sbr.rel (0) target = $region41
    $region40: #{_twonn_forward.1} parent=1 // pred_region
      _
    $region41: #{_twonn_forward.1} parent=1 // pred_fallthru
      _
    %984 = vsyncpa [#allocation3], 1

// kernel: _twonn_forward.1
$region0: #{_twonn_forward.1}
  #allocation0 [shape = 'u32[]', space=smem, size = 0x4, offset = 0x4, fixed_abs, tag = 'smem constant byte address 0x4 - core index']
  #allocation1 [shape = 'u32[144,128]{1,0:T(1,128)}', space=vmem, size = 0x12000, scoped, tag = 'internal scratch']
  %s0 = inlined_call_operand.vmem [shape: f32[16,1024], index: 0, kind: input, shape index: {}]
  %s1 = inlined_call_operand.hbm [shape: bf16[1024,128], index: 1, kind: input, shape index: {}]
  %s2 = inlined_call_operand.vmem [shape: f32[1,128], index: 2, kind: input, shape index: {}]
  %s3 = inlined_call_operand.vmem [shape: bf16[128,128], index: 3, kind: input, shape index: {}]
  %s4 = inlined_call_operand.vmem [shape: f32[1,128], index: 4, kind: input, shape index: {}]
  %s5 = inlined_call_operand.vmem [shape: bf16[128,128], index: 5, kind: input, shape index: {}]
  %s6 = inlined_call_operand.vmem [shape: f32[1,128], index: 6, kind: input, shape index: {}]
  %s7 = inlined_call_operand.vmem [shape: f32[16,128], index: 7, kind: output, shape index: {}]
  %s8 = sld [smem:[#allocation0]]
  $region42: #{_twonn_forward.1} parent=0
    _
  %s10 = ssub.s32 1, %s8
  %s11 = scalar_select 0, %s10, %s8
  $region1: #{_twonn_forward.1} parent=0
    #allocation2 [shape = 'u8[262144]{0}', space=vmem, size = 0x40000, scoped, tag = 'input window, operand 1, single buffered']
    #allocation3 [shape = 's32[1]{0}', space=sflag, size = 0x4, scoped, tag = 'scoped memory for _twonn_forward.1']
    %12 = vsyncpa [#allocation3], 0
    // Predicated region
    $region2: #{_twonn_forward.1} parent=1 // pred_check
      _
    $region3: #{_twonn_forward.1} parent=1 // pred_check_branch
      %14 = sbr.rel (0) target = $region5
    $region4: #{_twonn_forward.1} parent=1 // pred_region
      _
    $region5: #{_twonn_forward.1} parent=1 // pred_fallthru
      _
    // Predicated region
    $region6: #{_twonn_forward.1} parent=1 // pred_check
      _
    $region7: #{_twonn_forward.1} parent=1 // pred_check_branch
      %16 = sbr.rel (0) target = $region9
    $region8: #{_twonn_forward.1} parent=1 // pred_region
      %s18 = ssub.s32 8192, 8192
      %19 = vsyncadd [#allocation3], %s18
      %s20 = sshll.u32 [#allocation2], 4
      %s21 = int_to_ptr.vmem [resolvable:$true] %s20
      %26 = dma.hbm_to_vmem [thread:$0]  %s1, 8192, %s21, [#allocation3], 64, 64, 4
    $region9: #{_twonn_forward.1} parent=1 // pred_fallthru
      _
    // Predicated region
    $region10: #{_twonn_forward.1} parent=1 // pred_check
      _
    $region11: #{_twonn_forward.1} parent=1 // pred_check_branch
      %28 = sbr.rel (0) target = $region13
    $region12: #{_twonn_forward.1} parent=1 // pred_region
      _
    $region13: #{_twonn_forward.1} parent=1 // pred_fallthru
      _
    // Predicated region
    $region14: #{_twonn_forward.1} parent=1 // pred_check
      _
    $region15: #{_twonn_forward.1} parent=1 // pred_check_branch
      %30 = sbr.rel (0) target = $region17
    $region16: #{_twonn_forward.1} parent=1 // pred_region
      _
    $region17: #{_twonn_forward.1} parent=1 // pred_fallthru
      _
    // Predicated region
    $region18: #{_twonn_forward.1} parent=1 // pred_check
      _
    $region19: #{_twonn_forward.1} parent=1 // pred_check_branch
      %32 = sbr.rel (0) target = $region21
    $region20: #{_twonn_forward.1} parent=1 // pred_region
      _
    $region21: #{_twonn_forward.1} parent=1 // pred_fallthru
      _
    // Predicated region
    $region22: #{_twonn_forward.1} parent=1 // pred_check
      _
    $region23: #{_twonn_forward.1} parent=1 // pred_check_branch
      %34 = sbr.rel (0) target = $region25
    $region24: #{_twonn_forward.1} parent=1 // pred_region
      _
    $region25: #{_twonn_forward.1} parent=1 // pred_fallthru
      _
    // Predicated region
    $region26: #{_twonn_forward.1} parent=1 // pred_check
      _
    $region27: #{_twonn_forward.1} parent=1 // pred_check_branch
      %36 = sbr.rel (0) target = $region29
    $region28: #{_twonn_forward.1} parent=1 // pred_region
      _
    $region29: #{_twonn_forward.1} parent=1 // pred_fallthru
      _
    // Predicated region
    $region30: #{_twonn_forward.1} parent=1 // pred_check
      _
    $region31: #{_twonn_forward.1} parent=1 // pred_check_branch
      %38 = sbr.rel (0) target = $region33
    $region32: #{_twonn_forward.1} parent=1 // pred_region
      %39 = dma.done [#allocation3], 8192
    $region33: #{_twonn_forward.1} parent=1 // pred_fallthru
      _
    %v41 = vld [vmem:[%s0] sm:$0xff]
    %v42 = vld [vmem:[%s0 + $0x8] sm:$0xff]
    %v43 = vld [vmem:[%s0 + $0x10] sm:$0xff]
    %v44 = vld [vmem:[%s0 + $0x18] sm:$0xff]
    %v45 = vld [vmem:[%s0 + $0x20] sm:$0xff]
    %v46 = vld [vmem:[%s0 + $0x28] sm:$0xff]
    %v47 = vld [vmem:[%s0 + $0x30] sm:$0xff]
    %v48 = vld [vmem:[%s0 + $0x38] sm:$0xff]
    %v49 = vld [vmem:[%s0 + $0x40] sm:$0xff]
    %v50 = vld [vmem:[%s0 + $0x48] sm:$0xff]
    %v51 = vld [vmem:[%s0 + $0x50] sm:$0xff]
    %v52 = vld [vmem:[%s0 + $0x58] sm:$0xff]
    %v53 = vld [vmem:[%s0 + $0x60] sm:$0xff]
    %v54 = vld [vmem:[%s0 + $0x68] sm:$0xff]
    %v55 = vld [vmem:[%s0 + $0x70] sm:$0xff]
    %v56 = vld [vmem:[%s0 + $0x78] sm:$0xff]
    %v57 = vpack.c.bf16 %v49, %v41
    %v58 = vpack.c.bf16 %v50, %v42
    %v59 = vpack.c.bf16 %v51, %v43
    %v60 = vpack.c.bf16 %v52, %v44
    %v61 = vpack.c.bf16 %v53, %v45
    %v62 = vpack.c.bf16 %v54, %v46
    %v63 = vpack.c.bf16 %v55, %v47
    %v64 = vpack.c.bf16 %v56, %v48
    %v65 = vld [vmem:[#allocation2] sm:$0xf]
    %v66 = vld [vmem:[#allocation2 + $0x4] sm:$0xf]
    %v67 = vld [vmem:[#allocation2 + $0x8] sm:$0xf]
    %v68 = vld [vmem:[#allocation2 + $0xc] sm:$0xf]
    %v69 = vld [vmem:[#allocation2 + $0x10] sm:$0xf]
    %v70 = vld [vmem:[#allocation2 + $0x14] sm:$0xf]
    %v71 = vld [vmem:[#allocation2 + $0x18] sm:$0xf]
    %v72 = vld [vmem:[#allocation2 + $0x1c] sm:$0xf]
    %v73 = vld [vmem:[#allocation2 + $0x20] sm:$0xf]
    %v74 = vld [vmem:[#allocation2 + $0x24] sm:$0xf]
    %v75 = vld [vmem:[#allocation2 + $0x28] sm:$0xf]
    %v76 = vld [vmem:[#allocation2 + $0x2c] sm:$0xf]
    %v77 = vld [vmem:[#allocation2 + $0x30] sm:$0xf]
    %v78 = vld [vmem:[#allocation2 + $0x34] sm:$0xf]
    %v79 = vld [vmem:[#allocation2 + $0x38] sm:$0xf]
    %v80 = vld [vmem:[#allocation2 + $0x3c] sm:$0xf]
    %v81 = vld [vmem:[#allocation2 + $0x40] sm:$0xf]
    %v82 = vld [vmem:[#allocation2 + $0x44] sm:$0xf]
    %v83 = vld [vmem:[#allocation2 + $0x48] sm:$0xf]
    %v84 = vld [vmem:[#allocation2 + $0x4c] sm:$0xf]
    %v85 = vld [vmem:[#allocation2 + $0x50] sm:$0xf]
    %v86 = vld [vmem:[#allocation2 + $0x54] sm:$0xf]
    %v87 = vld [vmem:[#allocation2 + $0x58] sm:$0xf]
    %v88 = vld [vmem:[#allocation2 + $0x5c] sm:$0xf]
    %v89 = vld [vmem:[#allocation2 + $0x60] sm:$0xf]
    %v90 = vld [vmem:[#allocation2 + $0x64] sm:$0xf]
    %v91 = vld [vmem:[#allocation2 + $0x68] sm:$0xf]
    %v92 = vld [vmem:[#allocation2 + $0x6c] sm:$0xf]
    %v93 = vld [vmem:[#allocation2 + $0x70] sm:$0xf]
    %v94 = vld [vmem:[#allocation2 + $0x74] sm:$0xf]
    %v95 = vld [vmem:[#allocation2 + $0x78] sm:$0xf]
    %v96 = vld [vmem:[#allocation2 + $0x7c] sm:$0xf]
    %v97 = vld [vmem:[#allocation2 + $0x80] sm:$0xf]
    %v98 = vld [vmem:[#allocation2 + $0x84] sm:$0xf]
    %v99 = vld [vmem:[#allocation2 + $0x88] sm:$0xf]
    %v100 = vld [vmem:[#allocation2 + $0x8c] sm:$0xf]
    %v101 = vld [vmem:[#allocation2 + $0x90] sm:$0xf]
    %v102 = vld [vmem:[#allocation2 + $0x94] sm:$0xf]
    %v103 = vld [vmem:[#allocation2 + $0x98] sm:$0xf]
    %v104 = vld [vmem:[#allocation2 + $0x9c] sm:$0xf]
    %v105 = vld [vmem:[#allocation2 + $0xa0] sm:$0xf]
    %v106 = vld [vmem:[#allocation2 + $0xa4] sm:$0xf]
    %v107 = vld [vmem:[#allocation2 + $0xa8] sm:$0xf]
    %v108 = vld [vmem:[#allocation2 + $0xac] sm:$0xf]
    %v109 = vld [vmem:[#allocation2 + $0xb0] sm:$0xf]
    %v110 = vld [vmem:[#allocation2 + $0xb4] sm:$0xf]
    %v111 = vld [vmem:[#allocation2 + $0xb8] sm:$0xf]
    %v112 = vld [vmem:[#allocation2 + $0xbc] sm:$0xf]
    %v113 = vld [vmem:[#allocation2 + $0xc0] sm:$0xf]
    %v114 = vld [vmem:[#allocation2 + $0xc4] sm:$0xf]
    %v115 = vld [vmem:[#allocation2 + $0xc8] sm:$0xf]
    %v116 = vld [vmem:[#allocation2 + $0xcc] sm:$0xf]
    %v117 = vld [vmem:[#allocation2 + $0xd0] sm:$0xf]
    %v118 = vld [vmem:[#allocation2 + $0xd4] sm:$0xf]
    %v119 = vld [vmem:[#allocation2 + $0xd8] sm:$0xf]
    %v120 = vld [vmem:[#allocation2 + $0xdc] sm:$0xf]
    %v121 = vld [vmem:[#allocation2 + $0xe0] sm:$0xf]
    %v122 = vld [vmem:[#allocation2 + $0xe4] sm:$0xf]
    %v123 = vld [vmem:[#allocation2 + $0xe8] sm:$0xf]
    %v124 = vld [vmem:[#allocation2 + $0xec] sm:$0xf]
    %v125 = vld [vmem:[#allocation2 + $0xf0] sm:$0xf]
    %v126 = vld [vmem:[#allocation2 + $0xf4] sm:$0xf]
    %v127 = vld [vmem:[#allocation2 + $0xf8] sm:$0xf]
    %v128 = vld [vmem:[#allocation2 + $0xfc] sm:$0xf]
    %v129 = vld [vmem:[#allocation2 + $0x100] sm:$0xf]
    %v130 = vld [vmem:[#allocation2 + $0x104] sm:$0xf]
    %v131 = vld [vmem:[#allocation2 + $0x108] sm:$0xf]
    %v132 = vld [vmem:[#allocation2 + $0x10c] sm:$0xf]
    %v133 = vld [vmem:[#allocation2 + $0x110] sm:$0xf]
    %v134 = vld [vmem:[#allocation2 + $0x114] sm:$0xf]
    %v135 = vld [vmem:[#allocation2 + $0x118] sm:$0xf]
    %v136 = vld [vmem:[#allocation2 + $0x11c] sm:$0xf]
    %v137 = vld [vmem:[#allocation2 + $0x120] sm:$0xf]
    %v138 = vld [vmem:[#allocation2 + $0x124] sm:$0xf]
    %v139 = vld [vmem:[#allocation2 + $0x128] sm:$0xf]
    %v140 = vld [vmem:[#allocation2 + $0x12c] sm:$0xf]
    %v141 = vld [vmem:[#allocation2 + $0x130] sm:$0xf]
    %v142 = vld [vmem:[#allocation2 + $0x134] sm:$0xf]
    %v143 = vld [vmem:[#allocation2 + $0x138] sm:$0xf]
    %v144 = vld [vmem:[#allocation2 + $0x13c] sm:$0xf]
    %v145 = vld [vmem:[#allocation2 + $0x140] sm:$0xf]
    %v146 = vld [vmem:[#allocation2 + $0x144] sm:$0xf]
    %v147 = vld [vmem:[#allocation2 + $0x148] sm:$0xf]
    %v148 = vld [vmem:[#allocation2 + $0x14c] sm:$0xf]
    %v149 = vld [vmem:[#allocation2 + $0x150] sm:$0xf]
    %v150 = vld [vmem:[#allocation2 + $0x154] sm:$0xf]
    %v151 = vld [vmem:[#allocation2 + $0x158] sm:$0xf]
    %v152 = vld [vmem:[#allocation2 + $0x15c] sm:$0xf]
    %v153 = vld [vmem:[#allocation2 + $0x160] sm:$0xf]
    %v154 = vld [vmem:[#allocation2 + $0x164] sm:$0xf]
    %v155 = vld [vmem:[#allocation2 + $0x168] sm:$0xf]
    %v156 = vld [vmem:[#allocation2 + $0x16c] sm:$0xf]
    %v157 = vld [vmem:[#allocation2 + $0x170] sm:$0xf]
    %v158 = vld [vmem:[#allocation2 + $0x174] sm:$0xf]
    %v159 = vld [vmem:[#allocation2 + $0x178] sm:$0xf]
    %v160 = vld [vmem:[#allocation2 + $0x17c] sm:$0xf]
    %v161 = vld [vmem:[#allocation2 + $0x180] sm:$0xf]
    %v162 = vld [vmem:[#allocation2 + $0x184] sm:$0xf]
    %v163 = vld [vmem:[#allocation2 + $0x188] sm:$0xf]
    %v164 = vld [vmem:[#allocation2 + $0x18c] sm:$0xf]
    %v165 = vld [vmem:[#allocation2 + $0x190] sm:$0xf]
    %v166 = vld [vmem:[#allocation2 + $0x194] sm:$0xf]
    %v167 = vld [vmem:[#allocation2 + $0x198] sm:$0xf]
    %v168 = vld [vmem:[#allocation2 + $0x19c] sm:$0xf]
    %v169 = vld [vmem:[#allocation2 + $0x1a0] sm:$0xf]
    %v170 = vld [vmem:[#allocation2 + $0x1a4] sm:$0xf]
    %v171 = vld [vmem:[#allocation2 + $0x1a8] sm:$0xf]
    %v172 = vld [vmem:[#allocation2 + $0x1ac] sm:$0xf]
    %v173 = vld [vmem:[#allocation2 + $0x1b0] sm:$0xf]
    %v174 = vld [vmem:[#allocation2 + $0x1b4] sm:$0xf]
    %v175 = vld [vmem:[#allocation2 + $0x1b8] sm:$0xf]
    %v176 = vld [vmem:[#allocation2 + $0x1bc] sm:$0xf]
    %v177 = vld [vmem:[#allocation2 + $0x1c0] sm:$0xf]
    %v178 = vld [vmem:[#allocation2 + $0x1c4] sm:$0xf]
    %v179 = vld [vmem:[#allocation2 + $0x1c8] sm:$0xf]
    %v180 = vld [vmem:[#allocation2 + $0x1cc] sm:$0xf]
    %v181 = vld [vmem:[#allocation2 + $0x1d0] sm:$0xf]
    %v182 = vld [vmem:[#allocation2 + $0x1d4] sm:$0xf]
    %v183 = vld [vmem:[#allocation2 + $0x1d8] sm:$0xf]
    %v184 = vld [vmem:[#allocation2 + $0x1dc] sm:$0xf]
    %v185 = vld [vmem:[#allocation2 + $0x1e0] sm:$0xf]
    %v186 = vld [vmem:[#allocation2 + $0x1e4] sm:$0xf]
    %v187 = vld [vmem:[#allocation2 + $0x1e8] sm:$0xf]
    %v188 = vld [vmem:[#allocation2 + $0x1ec] sm:$0xf]
    %v189 = vld [vmem:[#allocation2 + $0x1f0] sm:$0xf]
    %v190 = vld [vmem:[#allocation2 + $0x1f4] sm:$0xf]
    %v191 = vld [vmem:[#allocation2 + $0x1f8] sm:$0xf]
    %v192 = vld [vmem:[#allocation2 + $0x1fc] sm:$0xf]
    %v193 = vld [vmem:[%s2] sm:$0x1]
    %v195 = vlaneseq
    %v196 = vshrl.u32 %v195, 7
    %v197 = vsub.s32 0, %v196
    %v198 = vrot.slane %v193, %v197
    %v328 = vunpack.c.l.b16 %v65
    %v329 = vunpack.c.l.b16 %v66
    %v330 = vunpack.c.l.b16 %v67
    %v331 = vunpack.c.l.b16 %v68
    %v332 = vunpack.c.l.b16 %v69
    %v333 = vunpack.c.l.b16 %v70
    %v334 = vunpack.c.l.b16 %v71
    %v335 = vunpack.c.l.b16 %v72
    %v336 = vunpack.c.l.b16 %v73
    %v337 = vunpack.c.l.b16 %v74
    %v338 = vunpack.c.l.b16 %v75
    %v339 = vunpack.c.l.b16 %v76
    %v340 = vunpack.c.l.b16 %v77
    %v341 = vunpack.c.l.b16 %v78
    %v342 = vunpack.c.l.b16 %v79
    %v343 = vunpack.c.l.b16 %v80
    %v344 = vunpack.c.l.b16 %v81
    %v345 = vunpack.c.l.b16 %v82
    %v346 = vunpack.c.l.b16 %v83
    %v347 = vunpack.c.l.b16 %v84
    %v348 = vunpack.c.l.b16 %v85
    %v349 = vunpack.c.l.b16 %v86
    %v350 = vunpack.c.l.b16 %v87
    %v351 = vunpack.c.l.b16 %v88
    %v352 = vunpack.c.l.b16 %v89
    %v353 = vunpack.c.l.b16 %v90
    %v354 = vunpack.c.l.b16 %v91
    %v355 = vunpack.c.l.b16 %v92
    %v356 = vunpack.c.l.b16 %v93
    %v357 = vunpack.c.l.b16 %v94
    %v358 = vunpack.c.l.b16 %v95
    %v359 = vunpack.c.l.b16 %v96
    %v360 = vunpack.c.l.b16 %v97
    %v361 = vunpack.c.l.b16 %v98
    %v362 = vunpack.c.l.b16 %v99
    %v363 = vunpack.c.l.b16 %v100
    %v364 = vunpack.c.l.b16 %v101
    %v365 = vunpack.c.l.b16 %v102
    %v366 = vunpack.c.l.b16 %v103
    %v367 = vunpack.c.l.b16 %v104
    %v368 = vunpack.c.l.b16 %v105
    %v369 = vunpack.c.l.b16 %v106
    %v370 = vunpack.c.l.b16 %v107
    %v371 = vunpack.c.l.b16 %v108
    %v372 = vunpack.c.l.b16 %v109
    %v373 = vunpack.c.l.b16 %v110
    %v374 = vunpack.c.l.b16 %v111
    %v375 = vunpack.c.l.b16 %v112
    %v376 = vunpack.c.l.b16 %v113
    %v377 = vunpack.c.l.b16 %v114
    %v378 = vunpack.c.l.b16 %v115
    %v379 = vunpack.c.l.b16 %v116
    %v380 = vunpack.c.l.b16 %v117
    %v381 = vunpack.c.l.b16 %v118
    %v382 = vunpack.c.l.b16 %v119
    %v383 = vunpack.c.l.b16 %v120
    %v384 = vunpack.c.l.b16 %v121
    %v385 = vunpack.c.l.b16 %v122
    %v386 = vunpack.c.l.b16 %v123
    %v387 = vunpack.c.l.b16 %v124
    %v388 = vunpack.c.l.b16 %v125
    %v389 = vunpack.c.l.b16 %v126
    %v390 = vunpack.c.l.b16 %v127
    %v391 = vunpack.c.l.b16 %v128
    %v392 = vunpack.c.l.b16 %v129
    %v393 = vunpack.c.l.b16 %v130
    %v394 = vunpack.c.l.b16 %v131
    %v395 = vunpack.c.l.b16 %v132
    %v396 = vunpack.c.l.b16 %v133
    %v397 = vunpack.c.l.b16 %v134
    %v398 = vunpack.c.l.b16 %v135
    %v399 = vunpack.c.l.b16 %v136
    %v400 = vunpack.c.l.b16 %v137
    %v401 = vunpack.c.l.b16 %v138
    %v402 = vunpack.c.l.b16 %v139
    %v403 = vunpack.c.l.b16 %v140
    %v404 = vunpack.c.l.b16 %v141
    %v405 = vunpack.c.l.b16 %v142
    %v406 = vunpack.c.l.b16 %v143
    %v407 = vunpack.c.l.b16 %v144
    %v408 = vunpack.c.l.b16 %v145
    %v409 = vunpack.c.l.b16 %v146
    %v410 = vunpack.c.l.b16 %v147
    %v411 = vunpack.c.l.b16 %v148
    %v412 = vunpack.c.l.b16 %v149
    %v413 = vunpack.c.l.b16 %v150
    %v414 = vunpack.c.l.b16 %v151
    %v415 = vunpack.c.l.b16 %v152
    %v416 = vunpack.c.l.b16 %v153
    %v417 = vunpack.c.l.b16 %v154
    %v418 = vunpack.c.l.b16 %v155
    %v419 = vunpack.c.l.b16 %v156
    %v420 = vunpack.c.l.b16 %v157
    %v421 = vunpack.c.l.b16 %v158
    %v422 = vunpack.c.l.b16 %v159
    %v423 = vunpack.c.l.b16 %v160
    %v424 = vunpack.c.l.b16 %v161
    %v425 = vunpack.c.l.b16 %v162
    %v426 = vunpack.c.l.b16 %v163
    %v427 = vunpack.c.l.b16 %v164
    %v428 = vunpack.c.l.b16 %v165
    %v429 = vunpack.c.l.b16 %v166
    %v430 = vunpack.c.l.b16 %v167
    %v431 = vunpack.c.l.b16 %v168
    %v432 = vunpack.c.l.b16 %v169
    %v433 = vunpack.c.l.b16 %v170
    %v434 = vunpack.c.l.b16 %v171
    %v435 = vunpack.c.l.b16 %v172
    %v436 = vunpack.c.l.b16 %v173
    %v437 = vunpack.c.l.b16 %v174
    %v438 = vunpack.c.l.b16 %v175
    %v439 = vunpack.c.l.b16 %v176
    %v440 = vunpack.c.l.b16 %v177
    %v441 = vunpack.c.l.b16 %v178
    %v442 = vunpack.c.l.b16 %v179
    %v443 = vunpack.c.l.b16 %v180
    %v444 = vunpack.c.l.b16 %v181
    %v445 = vunpack.c.l.b16 %v182
    %v446 = vunpack.c.l.b16 %v183
    %v447 = vunpack.c.l.b16 %v184
    %v448 = vunpack.c.l.b16 %v185
    %v449 = vunpack.c.l.b16 %v186
    %v450 = vunpack.c.l.b16 %v187
    %v451 = vunpack.c.l.b16 %v188
    %v452 = vunpack.c.l.b16 %v189
    %v453 = vunpack.c.l.b16 %v190
    %v454 = vunpack.c.l.b16 %v191
    %v455 = vunpack.c.l.b16 %v192
    %v456 = vpack.c.b16 %v329, %v328
    %v457 = vpack.c.b16 %v331, %v330
    %v458 = vpack.c.b16 %v333, %v332
    %v459 = vpack.c.b16 %v335, %v334
    %v460 = vpack.c.b16 %v337, %v336
    %v461 = vpack.c.b16 %v339, %v338
    %v462 = vpack.c.b16 %v341, %v340
    %v463 = vpack.c.b16 %v343, %v342
    %v464 = vpack.c.b16 %v345, %v344
    %v465 = vpack.c.b16 %v347, %v346
    %v466 = vpack.c.b16 %v349, %v348
    %v467 = vpack.c.b16 %v351, %v350
    %v468 = vpack.c.b16 %v353, %v352
    %v469 = vpack.c.b16 %v355, %v354
    %v470 = vpack.c.b16 %v357, %v356
    %v471 = vpack.c.b16 %v359, %v358
    %v472 = vpack.c.b16 %v361, %v360
    %v473 = vpack.c.b16 %v363, %v362
    %v474 = vpack.c.b16 %v365, %v364
    %v475 = vpack.c.b16 %v367, %v366
    %v476 = vpack.c.b16 %v369, %v368
    %v477 = vpack.c.b16 %v371, %v370
    %v478 = vpack.c.b16 %v373, %v372
    %v479 = vpack.c.b16 %v375, %v374
    %v480 = vpack.c.b16 %v377, %v376
    %v481 = vpack.c.b16 %v379, %v378
    %v482 = vpack.c.b16 %v381, %v380
    %v483 = vpack.c.b16 %v383, %v382
    %v484 = vpack.c.b16 %v385, %v384
    %v485 = vpack.c.b16 %v387, %v386
    %v486 = vpack.c.b16 %v389, %v388
    %v487 = vpack.c.b16 %v391, %v390
    %v488 = vpack.c.b16 %v393, %v392
    %v489 = vpack.c.b16 %v395, %v394
    %v490 = vpack.c.b16 %v397, %v396
    %v491 = vpack.c.b16 %v399, %v398
    %v492 = vpack.c.b16 %v401, %v400
    %v493 = vpack.c.b16 %v403, %v402
    %v494 = vpack.c.b16 %v405, %v404
    %v495 = vpack.c.b16 %v407, %v406
    %v496 = vpack.c.b16 %v409, %v408
    %v497 = vpack.c.b16 %v411, %v410
    %v498 = vpack.c.b16 %v413, %v412
    %v499 = vpack.c.b16 %v415, %v414
    %v500 = vpack.c.b16 %v417, %v416
    %v501 = vpack.c.b16 %v419, %v418
    %v502 = vpack.c.b16 %v421, %v420
    %v503 = vpack.c.b16 %v423, %v422
    %v504 = vpack.c.b16 %v425, %v424
    %v505 = vpack.c.b16 %v427, %v426
    %v506 = vpack.c.b16 %v429, %v428
    %v507 = vpack.c.b16 %v431, %v430
    %v508 = vpack.c.b16 %v433, %v432
    %v509 = vpack.c.b16 %v435, %v434
    %v510 = vpack.c.b16 %v437, %v436
    %v511 = vpack.c.b16 %v439, %v438
    %v512 = vpack.c.b16 %v441, %v440
    %v513 = vpack.c.b16 %v443, %v442
    %v514 = vpack.c.b16 %v445, %v444
    %v515 = vpack.c.b16 %v447, %v446
    %v516 = vpack.c.b16 %v449, %v448
    %v517 = vpack.c.b16 %v451, %v450
    %v518 = vpack.c.b16 %v453, %v452
    %v519 = vpack.c.b16 %v455, %v454
    %584 = vmatprep.subr.bf16.mxu0 0
    %585 = vmatpush1.bf16.msra.mxu0 %v456
    %586 = vmatprep.subr.bf16.mxu0 0
    %587 = vmatpush1.bf16.msra.mxu0 %v457
    %588 = vmatprep.subr.bf16.mxu0 0
    %589 = vmatpush1.bf16.msra.mxu0 %v458
    %590 = vmatprep.subr.bf16.mxu0 0
    %591 = vmatpush1.bf16.msra.mxu0 %v459
    %592 = vmatprep.subr.bf16.mxu0 0
    %593 = vmatpush1.bf16.msra.mxu0 %v460
    %594 = vmatprep.subr.bf16.mxu0 0
    %595 = vmatpush1.bf16.msra.mxu0 %v461
    %596 = vmatprep.subr.bf16.mxu0 0
    %597 = vmatpush1.bf16.msra.mxu0 %v462
    %598 = vmatprep.subr.bf16.mxu0 0
    %599 = vmatpush1.bf16.msra.mxu0 %v463
    %600 = vmatprep.subr.bf16.mxu0 0
    %601 = vmatpush1.bf16.msra.mxu0 %v464
    %602 = vmatprep.subr.bf16.mxu0 0
    %603 = vmatpush1.bf16.msra.mxu0 %v465
    %604 = vmatprep.subr.bf16.mxu0 0
    %605 = vmatpush1.bf16.msra.mxu0 %v466
    %606 = vmatprep.subr.bf16.mxu0 0
    %607 = vmatpush1.bf16.msra.mxu0 %v467
    %608 = vmatprep.subr.bf16.mxu0 0
    %609 = vmatpush1.bf16.msra.mxu0 %v468
    %610 = vmatprep.subr.bf16.mxu0 0
    %611 = vmatpush1.bf16.msra.mxu0 %v469
    %612 = vmatprep.subr.bf16.mxu0 0
    %613 = vmatpush1.bf16.msra.mxu0 %v470
    %614 = vmatprep.subr.bf16.mxu0 0
    %615 = vmatpush1.bf16.msra.mxu0 %v471
    %616 = vmatprep.mubr.bf16.mxu0 %v58
    %617 = vmatmul.mubr.bf16.gmra.mrb[0].mxu0 %v57
    %v618 = vpop.f32.mrb[0].mxu0
    %v619 = vadd.f32 %v198, %v618
    %v620 = vpop.f32.mrb[0].mxu0
    %v621 = vpop.f32.mrb[0].mxu0
    %v622 = vadd.f32 %v198, %v621
    %v623 = vpop.f32.mrb[0].mxu0
    %624 = vdwg.mxu0
    %625 = vmatprep.subr.bf16.mxu0 0
    %626 = vmatpush1.bf16.msra.mxu0 %v472
    %627 = vmatprep.subr.bf16.mxu0 0
    %628 = vmatpush1.bf16.msra.mxu0 %v473
    %629 = vmatprep.subr.bf16.mxu0 0
    %630 = vmatpush1.bf16.msra.mxu0 %v474
    %631 = vmatprep.subr.bf16.mxu0 0
    %632 = vmatpush1.bf16.msra.mxu0 %v475
    %633 = vmatprep.subr.bf16.mxu0 0
    %634 = vmatpush1.bf16.msra.mxu0 %v476
    %635 = vmatprep.subr.bf16.mxu0 0
    %636 = vmatpush1.bf16.msra.mxu0 %v477
    %637 = vmatprep.subr.bf16.mxu0 0
    %638 = vmatpush1.bf16.msra.mxu0 %v478
    %639 = vmatprep.subr.bf16.mxu0 0
    %640 = vmatpush1.bf16.msra.mxu0 %v479
    %641 = vmatprep.subr.bf16.mxu0 0
    %642 = vmatpush1.bf16.msra.mxu0 %v480
    %643 = vmatprep.subr.bf16.mxu0 0
    %644 = vmatpush1.bf16.msra.mxu0 %v481
    %645 = vmatprep.subr.bf16.mxu0 0
    %646 = vmatpush1.bf16.msra.mxu0 %v482
    %647 = vmatprep.subr.bf16.mxu0 0
    %648 = vmatpush1.bf16.msra.mxu0 %v483
    %649 = vmatprep.subr.bf16.mxu0 0
    %650 = vmatpush1.bf16.msra.mxu0 %v484
    %651 = vmatprep.subr.bf16.mxu0 0
    %652 = vmatpush1.bf16.msra.mxu0 %v485
    %653 = vmatprep.subr.bf16.mxu0 0
    %654 = vmatpush1.bf16.msra.mxu0 %v486
    %655 = vmatprep.subr.bf16.mxu0 0
    %656 = vmatpush1.bf16.msra.mxu0 %v487
    %657 = vmatprep.mubr.bf16.mxu0 %v60
    %658 = vmatmul.mubr.bf16.gmra.mrb[0].mxu0 %v59
    %v659 = vpop.f32.mrb[0].mxu0
    %v660 = vadd.f32 %v619, %v659
    %v661 = vpop.f32.mrb[0].mxu0
    %v662 = vpop.f32.mrb[0].mxu0
    %v663 = vadd.f32 %v622, %v662
    %v664 = vpop.f32.mrb[0].mxu0
    %665 = vdwg.mxu0
    %666 = vmatprep.subr.bf16.mxu0 0
    %667 = vmatpush1.bf16.msra.mxu0 %v488
    %668 = vmatprep.subr.bf16.mxu0 0
    %669 = vmatpush1.bf16.msra.mxu0 %v489
    %670 = vmatprep.subr.bf16.mxu0 0
    %671 = vmatpush1.bf16.msra.mxu0 %v490
    %672 = vmatprep.subr.bf16.mxu0 0
    %673 = vmatpush1.bf16.msra.mxu0 %v491
    %674 = vmatprep.subr.bf16.mxu0 0
    %675 = vmatpush1.bf16.msra.mxu0 %v492
    %676 = vmatprep.subr.bf16.mxu0 0
    %677 = vmatpush1.bf16.msra.mxu0 %v493
    %678 = vmatprep.subr.bf16.mxu0 0
    %679 = vmatpush1.bf16.msra.mxu0 %v494
    %680 = vmatprep.subr.bf16.mxu0 0
    %681 = vmatpush1.bf16.msra.mxu0 %v495
    %682 = vmatprep.subr.bf16.mxu0 0
    %683 = vmatpush1.bf16.msra.mxu0 %v496
    %684 = vmatprep.subr.bf16.mxu0 0
    %685 = vmatpush1.bf16.msra.mxu0 %v497
    %686 = vmatprep.subr.bf16.mxu0 0
    %687 = vmatpush1.bf16.msra.mxu0 %v498
    %688 = vmatprep.subr.bf16.mxu0 0
    %689 = vmatpush1.bf16.msra.mxu0 %v499
    %690 = vmatprep.subr.bf16.mxu0 0
    %691 = vmatpush1.bf16.msra.mxu0 %v500
    %692 = vmatprep.subr.bf16.mxu0 0
    %693 = vmatpush1.bf16.msra.mxu0 %v501
    %694 = vmatprep.subr.bf16.mxu0 0
    %695 = vmatpush1.bf16.msra.mxu0 %v502
    %696 = vmatprep.subr.bf16.mxu0 0
    %697 = vmatpush1.bf16.msra.mxu0 %v503
    %698 = vmatprep.mubr.bf16.mxu0 %v62
    %699 = vmatmul.mubr.bf16.gmra.mrb[0].mxu0 %v61
    %v700 = vpop.f32.mrb[0].mxu0
    %v701 = vadd.f32 %v660, %v700
    %v702 = vpop.f32.mrb[0].mxu0
    %v703 = vpop.f32.mrb[0].mxu0
    %v704 = vadd.f32 %v663, %v703
    %v705 = vpop.f32.mrb[0].mxu0
    %706 = vdwg.mxu0
    %707 = vmatprep.subr.bf16.mxu0 0
    %708 = vmatpush1.bf16.msra.mxu0 %v504
    %709 = vmatprep.subr.bf16.mxu0 0
    %710 = vmatpush1.bf16.msra.mxu0 %v505
    %711 = vmatprep.subr.bf16.mxu0 0
    %712 = vmatpush1.bf16.msra.mxu0 %v506
    %713 = vmatprep.subr.bf16.mxu0 0
    %714 = vmatpush1.bf16.msra.mxu0 %v507
    %715 = vmatprep.subr.bf16.mxu0 0
    %716 = vmatpush1.bf16.msra.mxu0 %v508
    %717 = vmatprep.subr.bf16.mxu0 0
    %718 = vmatpush1.bf16.msra.mxu0 %v509
    %719 = vmatprep.subr.bf16.mxu0 0
    %720 = vmatpush1.bf16.msra.mxu0 %v510
    %721 = vmatprep.subr.bf16.mxu0 0
    %722 = vmatpush1.bf16.msra.mxu0 %v511
    %723 = vmatprep.subr.bf16.mxu0 0
    %724 = vmatpush1.bf16.msra.mxu0 %v512
    %725 = vmatprep.subr.bf16.mxu0 0
    %726 = vmatpush1.bf16.msra.mxu0 %v513
    %727 = vmatprep.subr.bf16.mxu0 0
    %728 = vmatpush1.bf16.msra.mxu0 %v514
    %729 = vmatprep.subr.bf16.mxu0 0
    %730 = vmatpush1.bf16.msra.mxu0 %v515
    %731 = vmatprep.subr.bf16.mxu0 0
    %732 = vmatpush1.bf16.msra.mxu0 %v516
    %733 = vmatprep.subr.bf16.mxu0 0
    %734 = vmatpush1.bf16.msra.mxu0 %v517
    %735 = vmatprep.subr.bf16.mxu0 0
    %736 = vmatpush1.bf16.msra.mxu0 %v518
    %737 = vmatprep.subr.bf16.mxu0 0
    %738 = vmatpush1.bf16.msra.mxu0 %v519
    %739 = vmatprep.mubr.bf16.mxu0 %v64
    %740 = vmatmul.mubr.bf16.gmra.mrb[0].mxu0 %v63
    %v741 = vpop.f32.mrb[0].mxu0
    %v742 = vadd.f32 %v701, %v741
    %v743 = vpop.f32.mrb[0].mxu0
    %v744 = vpop.f32.mrb[0].mxu0
    %v745 = vadd.f32 %v704, %v744
    %v746 = vpop.f32.mrb[0].mxu0
    %747 = vdwg.mxu0
    %v748 = vmax.f32 %v742, 0.0
    %v749 = vmax.f32 %v745, 0.0
    %v750 = vpack.c.bf16 %v749, %v748
    %v751 = vld [vmem:[%s3] sm:$0xf]
    %v752 = vld [vmem:[%s3 + $0x4] sm:$0xf]
    %v753 = vld [vmem:[%s3 + $0x8] sm:$0xf]
    %v754 = vld [vmem:[%s3 + $0xc] sm:$0xf]
    %v755 = vld [vmem:[%s3 + $0x10] sm:$0xf]
    %v756 = vld [vmem:[%s3 + $0x14] sm:$0xf]
    %v757 = vld [vmem:[%s3 + $0x18] sm:$0xf]
    %v758 = vld [vmem:[%s3 + $0x1c] sm:$0xf]
    %v759 = vld [vmem:[%s3 + $0x20] sm:$0xf]
    %v760 = vld [vmem:[%s3 + $0x24] sm:$0xf]
    %v761 = vld [vmem:[%s3 + $0x28] sm:$0xf]
    %v762 = vld [vmem:[%s3 + $0x2c] sm:$0xf]
    %v763 = vld [vmem:[%s3 + $0x30] sm:$0xf]
    %v764 = vld [vmem:[%s3 + $0x34] sm:$0xf]
    %v765 = vld [vmem:[%s3 + $0x38] sm:$0xf]
    %v766 = vld [vmem:[%s3 + $0x3c] sm:$0xf]
    %v767 = vld [vmem:[%s4] sm:$0x1]
    %v769 = vlaneseq
    %v770 = vshrl.u32 %v769, 7
    %v771 = vsub.s32 0, %v770
    %v772 = vrot.slane %v767, %v771
    %v790 = vunpack.c.l.b16 %v751
    %v791 = vunpack.c.l.b16 %v752
    %v792 = vunpack.c.l.b16 %v753
    %v793 = vunpack.c.l.b16 %v754
    %v794 = vunpack.c.l.b16 %v755
    %v795 = vunpack.c.l.b16 %v756
    %v796 = vunpack.c.l.b16 %v757
    %v797 = vunpack.c.l.b16 %v758
    %v798 = vunpack.c.l.b16 %v759
    %v799 = vunpack.c.l.b16 %v760
    %v800 = vunpack.c.l.b16 %v761
    %v801 = vunpack.c.l.b16 %v762
    %v802 = vunpack.c.l.b16 %v763
    %v803 = vunpack.c.l.b16 %v764
    %v804 = vunpack.c.l.b16 %v765
    %v805 = vunpack.c.l.b16 %v766
    %v806 = vpack.c.b16 %v791, %v790
    %v807 = vpack.c.b16 %v793, %v792
    %v808 = vpack.c.b16 %v795, %v794
    %v809 = vpack.c.b16 %v797, %v796
    %v810 = vpack.c.b16 %v799, %v798
    %v811 = vpack.c.b16 %v801, %v800
    %v812 = vpack.c.b16 %v803, %v802
    %v813 = vpack.c.b16 %v805, %v804
    %822 = vmatprep.subr.bf16.mxu0 0
    %823 = vmatpush1.bf16.msra.mxu0 %v806
    %824 = vmatprep.subr.bf16.mxu0 0
    %825 = vmatpush1.bf16.msra.mxu0 %v807
    %826 = vmatprep.subr.bf16.mxu0 0
    %827 = vmatpush1.bf16.msra.mxu0 %v808
    %828 = vmatprep.subr.bf16.mxu0 0
    %829 = vmatpush1.bf16.msra.mxu0 %v809
    %830 = vmatprep.subr.bf16.mxu0 0
    %831 = vmatpush1.bf16.msra.mxu0 %v810
    %832 = vmatprep.subr.bf16.mxu0 0
    %833 = vmatpush1.bf16.msra.mxu0 %v811
    %834 = vmatprep.subr.bf16.mxu0 0
    %835 = vmatpush1.bf16.msra.mxu0 %v812
    %836 = vmatprep.subr.bf16.mxu0 0
    %837 = vmatpush1.bf16.msra.mxu0 %v813
    %838 = vmatprep.subr.bf16.mxu0 0
    %839 = vmatpush1.bf16.msra.mxu0 0
    %840 = vmatprep.subr.bf16.mxu0 0
    %841 = vmatpush1.bf16.msra.mxu0 0
    %842 = vmatprep.subr.bf16.mxu0 0
    %843 = vmatpush1.bf16.msra.mxu0 0
    %844 = vmatprep.subr.bf16.mxu0 0
    %845 = vmatpush1.bf16.msra.mxu0 0
    %846 = vmatprep.subr.bf16.mxu0 0
    %847 = vmatpush1.bf16.msra.mxu0 0
    %848 = vmatprep.subr.bf16.mxu0 0
    %849 = vmatpush1.bf16.msra.mxu0 0
    %850 = vmatprep.subr.bf16.mxu0 0
    %851 = vmatpush1.bf16.msra.mxu0 0
    %852 = vmatprep.subr.bf16.mxu0 0
    %853 = vmatpush1.bf16.msra.mxu0 0
    %854 = vmatprep.mubr.bf16.mxu0 0
    %855 = vmatmul.mubr.bf16.gmra.mrb[0].mxu0 %v750
    %v856 = vpop.f32.mrb[0].mxu0
    %v857 = vadd.f32 %v772, %v856
    %v858 = vpop.f32.mrb[0].mxu0
    %v859 = vpop.f32.mrb[0].mxu0
    %v860 = vadd.f32 %v772, %v859
    %v861 = vpop.f32.mrb[0].mxu0
    %862 = vdwg.mxu0
    %v863 = vmax.f32 %v857, 0.0
    %v864 = vmax.f32 %v860, 0.0
    %v865 = vpack.c.bf16 %v864, %v863
    %v866 = vld [vmem:[%s5] sm:$0xf]
    %v867 = vld [vmem:[%s5 + $0x4] sm:$0xf]
    %v868 = vld [vmem:[%s5 + $0x8] sm:$0xf]
    %v869 = vld [vmem:[%s5 + $0xc] sm:$0xf]
    %v870 = vld [vmem:[%s5 + $0x10] sm:$0xf]
    %v871 = vld [vmem:[%s5 + $0x14] sm:$0xf]
    %v872 = vld [vmem:[%s5 + $0x18] sm:$0xf]
    %v873 = vld [vmem:[%s5 + $0x1c] sm:$0xf]
    %v874 = vld [vmem:[%s5 + $0x20] sm:$0xf]
    %v875 = vld [vmem:[%s5 + $0x24] sm:$0xf]
    %v876 = vld [vmem:[%s5 + $0x28] sm:$0xf]
    %v877 = vld [vmem:[%s5 + $0x2c] sm:$0xf]
    %v878 = vld [vmem:[%s5 + $0x30] sm:$0xf]
    %v879 = vld [vmem:[%s5 + $0x34] sm:$0xf]
    %v880 = vld [vmem:[%s5 + $0x38] sm:$0xf]
    %v881 = vld [vmem:[%s5 + $0x3c] sm:$0xf]
    %v882 = vld [vmem:[%s6] sm:$0x1]
    %v884 = vlaneseq
    %v885 = vshrl.u32 %v884, 7
    %v886 = vsub.s32 0, %v885
    %v887 = vrot.slane %v882, %v886
    %v905 = vunpack.c.l.b16 %v866
    %v906 = vunpack.c.l.b16 %v867
    %v907 = vunpack.c.l.b16 %v868
    %v908 = vunpack.c.l.b16 %v869
    %v909 = vunpack.c.l.b16 %v870
    %v910 = vunpack.c.l.b16 %v871
    %v911 = vunpack.c.l.b16 %v872
    %v912 = vunpack.c.l.b16 %v873
    %v913 = vunpack.c.l.b16 %v874
    %v914 = vunpack.c.l.b16 %v875
    %v915 = vunpack.c.l.b16 %v876
    %v916 = vunpack.c.l.b16 %v877
    %v917 = vunpack.c.l.b16 %v878
    %v918 = vunpack.c.l.b16 %v879
    %v919 = vunpack.c.l.b16 %v880
    %v920 = vunpack.c.l.b16 %v881
    %v921 = vpack.c.b16 %v906, %v905
    %v922 = vpack.c.b16 %v908, %v907
    %v923 = vpack.c.b16 %v910, %v909
    %v924 = vpack.c.b16 %v912, %v911
    %v925 = vpack.c.b16 %v914, %v913
    %v926 = vpack.c.b16 %v916, %v915
    %v927 = vpack.c.b16 %v918, %v917
    %v928 = vpack.c.b16 %v920, %v919
    %937 = vmatprep.subr.bf16.mxu0 0
    %938 = vmatpush1.bf16.msra.mxu0 %v921
    %939 = vmatprep.subr.bf16.mxu0 0
    %940 = vmatpush1.bf16.msra.mxu0 %v922
    %941 = vmatprep.subr.bf16.mxu0 0
    %942 = vmatpush1.bf16.msra.mxu0 %v923
    %943 = vmatprep.subr.bf16.mxu0 0
    %944 = vmatpush1.bf16.msra.mxu0 %v924
    %945 = vmatprep.subr.bf16.mxu0 0
    %946 = vmatpush1.bf16.msra.mxu0 %v925
    %947 = vmatprep.subr.bf16.mxu0 0
    %948 = vmatpush1.bf16.msra.mxu0 %v926
    %949 = vmatprep.subr.bf16.mxu0 0
    %950 = vmatpush1.bf16.msra.mxu0 %v927
    %951 = vmatprep.subr.bf16.mxu0 0
    %952 = vmatpush1.bf16.msra.mxu0 %v928
    %953 = vmatprep.subr.bf16.mxu0 0
    %954 = vmatpush1.bf16.msra.mxu0 0
    %955 = vmatprep.subr.bf16.mxu0 0
    %956 = vmatpush1.bf16.msra.mxu0 0
    %957 = vmatprep.subr.bf16.mxu0 0
    %958 = vmatpush1.bf16.msra.mxu0 0
    %959 = vmatprep.subr.bf16.mxu0 0
    %960 = vmatpush1.bf16.msra.mxu0 0
    %961 = vmatprep.subr.bf16.mxu0 0
    %962 = vmatpush1.bf16.msra.mxu0 0
    %963 = vmatprep.subr.bf16.mxu0 0
    %964 = vmatpush1.bf16.msra.mxu0 0
    %965 = vmatprep.subr.bf16.mxu0 0
    %966 = vmatpush1.bf16.msra.mxu0 0
    %967 = vmatprep.subr.bf16.mxu0 0
    %968 = vmatpush1.bf16.msra.mxu0 0
    %969 = vmatprep.mubr.bf16.mxu0 0
    %970 = vmatmul.mubr.bf16.gmra.mrb[0].mxu0 %v865
    %v971 = vpop.f32.mrb[0].mxu0
    %v972 = vadd.f32 %v887, %v971
    %v973 = vpop.f32.mrb[0].mxu0
    %v974 = vpop.f32.mrb[0].mxu0
    %v975 = vadd.f32 %v887, %v974
    %v976 = vpop.f32.mrb[0].mxu0
    %977 = vdwg.mxu0
    %978 = vst [vmem:[%s7] sm:$0xff] %v972
    %979 = vst [vmem:[%s7 + $0x8] sm:$0xff] %v975
    // Predicated region
    $region34: #{_twonn_forward.1} parent=1 // pred_check
      _
    $region35: #{_twonn_forward.1} parent=1 // pred_check_branch
      %981 = sbr.rel (0) target = $region37
    $region36: #{_twonn_forward.1} parent=1 // pred_region
      _
    $region37: #{_twonn_forward.1} parent=1 // pred_fallthru
      _
    // Predicated region
    $region38: #{_twonn_forward.1} parent=1 // pred_check
      _
    $region39: #{_twonn_forward.1} parent=1 // pred_check_branch
      %983 = sbr.rel (0) target = $region41
    $region40: #{_twonn_forward.1} parent=1 // pred_region
      _
    $region41: #{_twonn_forward.1} parent=1 // pred_fallthru
      _
    %984 = vsyncpa [#allocation3], 1

</llo_original>
